<compile_context>
chip_gen: v7x
topology: tpu7x:2x2x1
jax: 0.10.0
libtpu: 0.0.40
codegen_flags: <defaults>
</compile_context>

<pallas_src>
import jax
import jax.numpy as jnp
import numpy as np
from jax import lax
from jax.experimental import pallas as pl
from jax.experimental.pallas import tpu as pltpu

TE = 128  # edge-label tile = lane width (lane-dense unmasked output stores)


# ----------------------------------------------------------------------------
# Single fused Pallas kernel: encoder (2 SAGE layers, 2 edge types) + decoder.
# Grid: one step per tile of TE label edges; encoder gated to step 0.
# ----------------------------------------------------------------------------
def fused_model_kernel(
    # node features (compute dtype)
    x_c_ref, x_a_ref,
    # graph structure, edge type customer -> article
    src_ca_ref,    # [E1, 1] int32  source (customer) index per edge
    dst_ca_ref,    # [1, E1] int32  destination (article) index per edge
    invdeg_a_ref,  # [N_a, 1] f32   1 / in-degree of articles
    # graph structure, edge type article -> customer
    src_ac_ref, dst_ac_ref, invdeg_c_ref,
    # layer-1 SAGE weights (W_l acts on mean-aggregated src, W_r on dst)
    w1ca_l_ref, w1ca_r_ref, b1ca_ref,
    w1ac_l_ref, w1ac_r_ref, b1ac_ref,
    # layer-2 SAGE weights
    w2ca_l_ref, w2ca_r_ref, b2ca_ref,
    w2ac_l_ref, w2ac_r_ref, b2ac_ref,
    # decoder weights
    wd1c_ref, wd1a_ref, bd1_ref,   # lin1 split per node type, bias f32 [1,H]
    wd2t_ref, bd2_ref,             # lin2 as row vector [1,H], bias [1,1]
    # per-tile decoder gather indices
    row_ref,                       # [TE, 1] int32 customer row per label edge
    colp_ref,                      # [TE, 1] int32 article row + N_c
    # output
    o_ref,                         # [1, TE] f32 (edges on the lane axis)
    # scratch
    u_ref,                         # [N_c + N_a, H] per-node decoder activations
):
    f32 = jnp.float32
    cdt = x_c_ref.dtype
    n_c = x_c_ref.shape[0]
    n_a = x_a_ref.shape[0]

    # ---------------- encoder: runs once, result parked in VMEM scratch ------
    @pl.when(pl.program_id(0) == 0)
    def _encode():
        x_c = x_c_ref[...]
        x_a = x_a_ref[...]

        def one_hots(src_col_ref, dst_row_ref, n_src, n_dst):
            # Built in-kernel from O(E) index vectors; never materialized in HBM.
            e = src_col_ref.shape[0]
            oh_src = jnp.where(
                lax.broadcasted_iota(jnp.int32, (e, n_src), 1) == src_col_ref[...],
                1.0, 0.0).astype(cdt)                       # [E, N_src]
            oh_dst_t = jnp.where(
                lax.broadcasted_iota(jnp.int32, (n_dst, e), 0) == dst_row_ref[...],
                1.0, 0.0).astype(cdt)                       # [N_dst, E]
            return oh_src, oh_dst_t

        ohs_ca, ohdT_ca = one_hots(src_ca_ref, dst_ca_ref, n_c, n_a)
        ohs_ac, ohdT_ac = one_hots(src_ac_ref, dst_ac_ref, n_a, n_c)
        invd_a = invdeg_a_ref[...]
        invd_c = invdeg_c_ref[...]

        def mean_agg(oh_src, oh_dst_t, inv_deg, x_src):
            # gather (E,F) then scatter-add (N_dst,F); 1/deg applied in f32.
            gathered = jnp.dot(oh_src, x_src, preferred_element_type=f32).astype(cdt)
            summed = jnp.dot(oh_dst_t, gathered, preferred_element_type=f32)
            return (summed * inv_deg).astype(cdt)

        def sage(agg, x_dst, w_l_ref, w_r_ref, b_ref):
            # two dots + VPU add (no lane-axis concat); f32 accumulation.
            return (jnp.dot(agg, w_l_ref[...], preferred_element_type=f32)
                    + jnp.dot(x_dst, w_r_ref[...], preferred_element_type=f32)
                    + b_ref[...])

        # layer 1 (each dst type has exactly one incoming edge type -> 'sum'
        # over edge types is a single term here)
        h_a = sage(mean_agg(ohs_ca, ohdT_ca, invd_a, x_c), x_a,
                   w1ca_l_ref, w1ca_r_ref, b1ca_ref)
        h_c = sage(mean_agg(ohs_ac, ohdT_ac, invd_c, x_a), x_c,
                   w1ac_l_ref, w1ac_r_ref, b1ac_ref)
        h_a = jnp.maximum(h_a, 0.0).astype(cdt)   # ReLU + single cast
        h_c = jnp.maximum(h_c, 0.0).astype(cdt)

        # layer 2
        z_a = sage(mean_agg(ohs_ca, ohdT_ca, invd_a, h_c), h_a,
                   w2ca_l_ref, w2ca_r_ref, b2ca_ref).astype(cdt)
        z_c = sage(mean_agg(ohs_ac, ohdT_ac, invd_c, h_a), h_c,
                   w2ac_l_ref, w2ac_r_ref, b2ac_ref).astype(cdt)

        # decoder lin1 applied per node (E-independent); fused gather uses a
        # single two-hot matmul per edge tile below.
        u_ref[:n_c, :] = jnp.dot(z_c, wd1c_ref[...],
                                 preferred_element_type=f32).astype(cdt)
        u_ref[n_c:, :] = jnp.dot(z_a, wd1a_ref[...],
                                 preferred_element_type=f32).astype(cdt)

    # ---------------- decoder: one lane-dense tile of TE label edges ---------
    n_tot = u_ref.shape[0]
    te = row_ref.shape[0]
    iota = lax.broadcasted_iota(jnp.int32, (te, n_tot), 1)
    two_hot = jnp.where(
        jnp.logical_or(iota == row_ref[...], iota == colp_ref[...]),
        1.0, 0.0).astype(cdt)                                 # [TE, N_c+N_a]
    hd = jnp.dot(two_hot, u_ref[...], preferred_element_type=jnp.float32)
    hd = jnp.maximum(hd + bd1_ref[...], 0.0).astype(cdt)      # [TE, H]
    # lin2 with edges on the lane axis: [1,H] x [TE,H]^T -> [1,TE]
    out = lax.dot_general(wd2t_ref[...], hd, (((1,), (1,)), ((), ())),
                          preferred_element_type=jnp.float32) + bd2_ref[...]
    o_ref[...] = out


# ----------------------------------------------------------------------------
# Wrapper: O(E)/O(N) host prep only (indices, inverse degrees, dtype casts).
# ----------------------------------------------------------------------------
def model_forward(params, x_dict, edge_index_dict, edge_label_index, node_counts,
                  compute_dtype=jnp.float32):
    """compute_dtype=jnp.float32 (default, recommended on v5e) or jnp.bfloat16
    (full-rate MXU on v6e/v7x; accumulation stays f32)."""
    cdt = compute_dtype
    n_c, n_a = node_counts["customer"], node_counts["article"]
    et_ca = ("customer", "to", "article")
    et_ac = ("article", "rev_to", "customer")

    def edge_inputs(edge_index, n_dst):
        src = edge_index[0].astype(jnp.int32)
        dst = edge_index[1].astype(jnp.int32)
        deg = jnp.zeros((n_dst,), jnp.float32).at[dst].add(1.0)
        inv_deg = (1.0 / jnp.maximum(deg, 1.0)).reshape(n_dst, 1)
        return src.reshape(-1, 1), dst.reshape(1, -1), inv_deg

    src_ca, dst_ca, invdeg_a = edge_inputs(edge_index_dict[et_ca], n_a)
    src_ac, dst_ac, invdeg_c = edge_inputs(edge_index_dict[et_ac], n_c)

    row = edge_label_index[0].astype(jnp.int32)
    col = edge_label_index[1].astype(jnp.int32)
    n_lbl = row.shape[0]
    n_lbl_pad = pl.cdiv(n_lbl, TE) * TE
    n_tiles = n_lbl_pad // TE
    pad = n_lbl_pad - n_lbl
    row_pad = jnp.pad(row, (0, pad)).reshape(n_lbl_pad, 1)
    colp_pad = jnp.pad(col + n_c, (0, pad)).reshape(n_lbl_pad, 1)

    p1ca, p1ac = params["conv1"][et_ca], params["conv1"][et_ac]
    p2ca, p2ac = params["conv2"][et_ca], params["conv2"][et_ac]
    dec = params["dec"]
    hidden = dec["w1c"].shape[0]

    w = lambda a: a.astype(cdt)                      # weights/features in cdt
    x_c = x_dict["customer"].astype(cdt)
    x_a = x_dict["article"].astype(cdt)
    wd2t = dec["w2"].reshape(1, hidden).astype(cdt)  # [H,1] -> [1,H]

    inputs = (
        x_c, x_a,
        src_ca, dst_ca, invdeg_a,
        src_ac, dst_ac, invdeg_c,
        w(p1ca["w_l"]), w(p1ca["w_r"]), p1ca["b"],
        w(p1ac["w_l"]), w(p1ac["w_r"]), p1ac["b"],
        w(p2ca["w_l"]), w(p2ca["w_r"]), p2ca["b"],
        w(p2ac["w_l"]), w(p2ac["w_r"]), p2ac["b"],
        w(dec["w1c"]), w(dec["w1a"]), dec["b1"], wd2t, dec["b2"],
        row_pad, colp_pad,
    )

    # All arrays are 2-D; weights/features get constant index_maps (stay
    # VMEM-resident), label-index vectors are tiled per grid step.
    in_specs = ([pl.BlockSpec(a.shape, lambda t: (0, 0)) for a in inputs[:-2]]
                + [pl.BlockSpec((TE, 1), lambda t: (t, 0)),
                   pl.BlockSpec((TE, 1), lambda t: (t, 0))])

    # Advisory cost estimate so XLA schedules around the custom call sensibly.
    def mm(m, k, n):
        return 2 * m * k * n
    f_c, f_a, h = x_c.shape[1], x_a.shape[1], hidden
    e1, e2, el = src_ca.shape[0], src_ac.shape[0], n_lbl_pad
    flops = (
        mm(e1, n_c, f_c) + mm(n_a, e1, f_c) + mm(n_a, f_c, h) + mm(n_a, f_a, h)
        + mm(e2, n_a, f_a) + mm(n_c, e2, f_a) + mm(n_c, f_a, h) + mm(n_c, f_c, h)
        + mm(e1, n_c, h) + mm(n_a, e1, h) + 2 * mm(n_a, h, h)
        + mm(e2, n_a, h) + mm(n_c, e2, h) + 2 * mm(n_c, h, h)
        + mm(n_c, h, h) + mm(n_a, h, h) + mm(el, n_c + n_a, h) + mm(el, h, 1)
    )
    bytes_accessed = (sum(int(a.size) * a.dtype.itemsize for a in inputs)
                      + n_tiles * TE * 4)
    cost = pl.CostEstimate(flops=flops, transcendentals=0,
                           bytes_accessed=bytes_accessed)

    out2d = pl.pallas_call(
        fused_model_kernel,
        out_shape=jax.ShapeDtypeStruct((n_tiles, TE), jnp.float32),
        grid_spec=pltpu.PrefetchScalarGridSpec(
            num_scalar_prefetch=0,
            grid=(n_tiles,),
            in_specs=in_specs,
            out_specs=pl.BlockSpec((1, TE), lambda t: (t, 0)),
            scratch_shapes=[pltpu.VMEM((n_c + n_a, hidden), cdt)],
        ),
        compiler_params=pltpu.CompilerParams(
            # scratch (u_ref) carries across edge tiles -> 'arbitrary'.
            dimension_semantics=("arbitrary",),
            vmem_limit_bytes=32 * 1024 * 1024,
        ),
        cost_estimate=cost,
    )(*inputs)
    return out2d.reshape(-1)[:n_lbl]                 # .view(-1)


# ----------------------------------------------------------------------------
# Pure-JAX f32 reference for the correctness check.
# ----------------------------------------------------------------------------
def build_mean_adj(edge_index, n_src, n_dst):
    src, dst = edge_index[0], edge_index[1]
    a = jnp.zeros((n_dst, n_src), jnp.float32).at[dst, src].add(1.0)
    deg = a.sum(axis=1, keepdims=True)
    return a / jnp.maximum(deg, 1.0)


def reference_forward(params, x_dict, edge_index_dict, edge_label_index, node_counts):
    adjs = {
        et: build_mean_adj(ei, node_counts[et[0]], node_counts[et[2]])
        for et, ei in edge_index_dict.items()
    }

    def layer(x_in, lp):
        out = {}
        for et in edge_index_dict:
            s, _, d = et
            p = lp[et]
            y = adjs[et] @ x_in[s] @ p["w_l"] + x_in[d] @ p["w_r"] + p["b"]
            out[d] = y if d not in out else out[d] + y
        return out

    h = layer(x_dict, params["conv1"])
    h = {k: jnp.maximum(v, 0.0) for k, v in h.items()}
    z = layer(h, params["conv2"])
    row, col = edge_label_index[0], edge_label_index[1]
    zz = jnp.maximum(
        z["customer"][row] @ params["dec"]["w1c"]
        + z["article"][col] @ params["dec"]["w1a"]
        + params["dec"]["b1"],
        0.0,
    )
    return (zz @ params["dec"]["w2"] + params["dec"]["b2"]).reshape(-1)


# ----------------------------------------------------------------------------
# Deterministic parameter / input construction.
# ----------------------------------------------------------------------------
def init_params(key, hidden, feat_dims, edge_types):
    def lin(k, fan_in, fan_out):
        s = 1.0 / np.sqrt(fan_in)
        return jax.random.uniform(k, (fan_in, fan_out), jnp.float32, -s, s)

    params = {"conv1": {}, "conv2": {}}
    for et in edge_types:
        src_t, _, dst_t = et
        key, k1, k2, k3, k4, k5, k6 = jax.random.split(key, 7)
        params["conv1"][et] = {
            "w_l": lin(k1, feat_dims[src_t], hidden),
            "w_r": lin(k2, feat_dims[dst_t], hidden),
            "b": jax.random.uniform(k3, (1, hidden), jnp.float32, -0.1, 0.1),
        }
        params["conv2"][et] = {
            "w_l": lin(k4, hidden, hidden),
            "w_r": lin(k5, hidden, hidden),
            "b": jax.random.uniform(k6, (1, hidden), jnp.float32, -0.1, 0.1),
        }
    key, k1, k2, k3, k4, k5 = jax.random.split(key, 6)
    params["dec"] = {
        "w1c": lin(k1, hidden, hidden),   # rows of lin1 acting on z_customer
        "w1a": lin(k2, hidden, hidden),   # rows of lin1 acting on z_article
        "b1": jax.random.uniform(k3, (1, hidden), jnp.float32, -0.1, 0.1),
        "w2": lin(k4, hidden, 1),
        "b2": jax.random.uniform(k5, (1, 1), jnp.float32, -0.1, 0.1),
    }
    return params


if __name__ == "__main__":
    key = jax.random.PRNGKey(0)

    hidden_channels = 32
    node_counts = {"customer": 16, "article": 24}
    feat_dims = {"customer": 8, "article": 12}
    num_edges = 40
    num_label_edges = 10

    edge_types = [
        ("customer", "to", "article"),
        ("article", "rev_to", "customer"),
    ]

    key, kx1, kx2, ke, kl1, kl2 = jax.random.split(key, 6)
    x_dict = {
        "customer": jax.random.normal(
            kx1, (node_counts["customer"], feat_dims["customer"]), jnp.float32),
        "article": jax.random.normal(
            kx2, (node_counts["article"], feat_dims["article"]), jnp.float32),
    }

    cust_idx = jax.random.randint(ke, (num_edges,), 0, node_counts["customer"], jnp.int32)
    art_idx = jax.random.randint(kl1, (num_edges,), 0, node_counts["article"], jnp.int32)
    edge_index_dict = {
        ("customer", "to", "article"): jnp.stack([cust_idx, art_idx]),
        ("article", "rev_to", "customer"): jnp.stack([art_idx, cust_idx]),
    }

    kr, kc = jax.random.split(kl2)
    edge_label_index = jnp.stack([
        jax.random.randint(kr, (num_label_edges,), 0, node_counts["customer"], jnp.int32),
        jax.random.randint(kc, (num_label_edges,), 0, node_counts["article"], jnp.int32),
    ])

    key, kp = jax.random.split(key)
    params = init_params(kp, hidden_channels, feat_dims, edge_types)

    ref = reference_forward(params, x_dict, edge_index_dict, edge_label_index, node_counts)

    # f32 fused kernel (recommended path on v5e)
    out = model_forward(params, x_dict, edge_index_dict, edge_label_index, node_counts)
    out = jax.block_until_ready(out)
    assert out.shape == (num_label_edges,)
    np.testing.assert_allclose(np.asarray(out), np.asarray(ref), rtol=1e-2, atol=1e-2)

    # bf16 MXU-input path (full-rate MXU on v6e/v7x; f32 accumulation, f32 1/deg)
    out_bf16 = model_forward(params, x_dict, edge_index_dict, edge_label_index,
                             node_counts, compute_dtype=jnp.bfloat16)
    out_bf16 = jax.block_until_ready(out_bf16)
    np.testing.assert_allclose(np.asarray(out_bf16), np.asarray(ref), rtol=1e-1, atol=1e-1)

    print("KERNEL_OK")
</pallas_src>

<mosaic_0001>
module attributes {stable_mosaic.version = 11 : i64} {
  func.func @fused_model_kernel(%arg0: i32, %arg1: memref<16x8xf32, #tpu.memory_space<vmem>>, %arg2: memref<24x12xf32, #tpu.memory_space<vmem>>, %arg3: memref<40x1xi32, #tpu.memory_space<vmem>>, %arg4: memref<1x40xi32, #tpu.memory_space<vmem>>, %arg5: memref<24x1xf32, #tpu.memory_space<vmem>>, %arg6: memref<40x1xi32, #tpu.memory_space<vmem>>, %arg7: memref<1x40xi32, #tpu.memory_space<vmem>>, %arg8: memref<16x1xf32, #tpu.memory_space<vmem>>, %arg9: memref<8x32xf32, #tpu.memory_space<vmem>>, %arg10: memref<12x32xf32, #tpu.memory_space<vmem>>, %arg11: memref<1x32xf32, #tpu.memory_space<vmem>>, %arg12: memref<12x32xf32, #tpu.memory_space<vmem>>, %arg13: memref<8x32xf32, #tpu.memory_space<vmem>>, %arg14: memref<1x32xf32, #tpu.memory_space<vmem>>, %arg15: memref<32x32xf32, #tpu.memory_space<vmem>>, %arg16: memref<32x32xf32, #tpu.memory_space<vmem>>, %arg17: memref<1x32xf32, #tpu.memory_space<vmem>>, %arg18: memref<32x32xf32, #tpu.memory_space<vmem>>, %arg19: memref<32x32xf32, #tpu.memory_space<vmem>>, %arg20: memref<1x32xf32, #tpu.memory_space<vmem>>, %arg21: memref<32x32xf32, #tpu.memory_space<vmem>>, %arg22: memref<32x32xf32, #tpu.memory_space<vmem>>, %arg23: memref<1x32xf32, #tpu.memory_space<vmem>>, %arg24: memref<1x32xf32, #tpu.memory_space<vmem>>, %arg25: memref<1x1xf32, #tpu.memory_space<vmem>>, %arg26: memref<128x1xi32, #tpu.memory_space<vmem>>, %arg27: memref<128x1xi32, #tpu.memory_space<vmem>>, %arg28: memref<1x128xf32, #tpu.memory_space<vmem>>, %arg29: memref<40x32xf32, #tpu.memory_space<vmem>>) attributes {dimension_semantics = [#tpu.dimension_semantics<arbitrary>], iteration_bounds = array<i64: 1>, scalar_prefetch = 0 : i64, scratch_operands = 1 : i64, tpu.core_type = #tpu.core_type<tc>, window_params = [{pipeline_mode = #tpu.pipeline_mode<synchronous>, transform_indices = @transform_0, window_bounds = array<i64: 16, 8>}, {pipeline_mode = #tpu.pipeline_mode<synchronous>, transform_indices = @transform_1, window_bounds = array<i64: 24, 12>}, {pipeline_mode = #tpu.pipeline_mode<synchronous>, transform_indices = @transform_2, window_bounds = array<i64: 40, 1>}, {pipeline_mode = #tpu.pipeline_mode<synchronous>, transform_indices = @transform_3, window_bounds = array<i64: 1, 40>}, {pipeline_mode = #tpu.pipeline_mode<synchronous>, transform_indices = @transform_4, window_bounds = array<i64: 24, 1>}, {pipeline_mode = #tpu.pipeline_mode<synchronous>, transform_indices = @transform_5, window_bounds = array<i64: 40, 1>}, {pipeline_mode = #tpu.pipeline_mode<synchronous>, transform_indices = @transform_6, window_bounds = array<i64: 1, 40>}, {pipeline_mode = #tpu.pipeline_mode<synchronous>, transform_indices = @transform_7, window_bounds = array<i64: 16, 1>}, {pipeline_mode = #tpu.pipeline_mode<synchronous>, transform_indices = @transform_8, window_bounds = array<i64: 8, 32>}, {pipeline_mode = #tpu.pipeline_mode<synchronous>, transform_indices = @transform_9, window_bounds = array<i64: 12, 32>}, {pipeline_mode = #tpu.pipeline_mode<synchronous>, transform_indices = @transform_10, window_bounds = array<i64: 1, 32>}, {pipeline_mode = #tpu.pipeline_mode<synchronous>, transform_indices = @transform_11, window_bounds = array<i64: 12, 32>}, {pipeline_mode = #tpu.pipeline_mode<synchronous>, transform_indices = @transform_12, window_bounds = array<i64: 8, 32>}, {pipeline_mode = #tpu.pipeline_mode<synchronous>, transform_indices = @transform_13, window_bounds = array<i64: 1, 32>}, {pipeline_mode = #tpu.pipeline_mode<synchronous>, transform_indices = @transform_14, window_bounds = array<i64: 32, 32>}, {pipeline_mode = #tpu.pipeline_mode<synchronous>, transform_indices = @transform_15, window_bounds = array<i64: 32, 32>}, {pipeline_mode = #tpu.pipeline_mode<synchronous>, transform_indices = @transform_16, window_bounds = array<i64: 1, 32>}, {pipeline_mode = #tpu.pipeline_mode<synchronous>, transform_indices = @transform_17, window_bounds = array<i64: 32, 32>}, {pipeline_mode = #tpu.pipeline_mode<synchronous>, transform_indices = @transform_18, window_bounds = array<i64: 32, 32>}, {pipeline_mode = #tpu.pipeline_mode<synchronous>, transform_indices = @transform_19, window_bounds = array<i64: 1, 32>}, {pipeline_mode = #tpu.pipeline_mode<synchronous>, transform_indices = @transform_20, window_bounds = array<i64: 32, 32>}, {pipeline_mode = #tpu.pipeline_mode<synchronous>, transform_indices = @transform_21, window_bounds = array<i64: 32, 32>}, {pipeline_mode = #tpu.pipeline_mode<synchronous>, transform_indices = @transform_22, window_bounds = array<i64: 1, 32>}, {pipeline_mode = #tpu.pipeline_mode<synchronous>, transform_indices = @transform_23, window_bounds = array<i64: 1, 32>}, {pipeline_mode = #tpu.pipeline_mode<synchronous>, transform_indices = @transform_24, window_bounds = array<i64: 1, 1>}, {transform_indices = @transform_25, window_bounds = array<i64: 128, 1>}, {transform_indices = @transform_26, window_bounds = array<i64: 128, 1>}, {transform_indices = @transform_27, window_bounds = array<i64: 1, 128>}]} {
    %c0_i32 = arith.constant 0 : i32
    %0 = arith.cmpi eq, %arg0, %c0_i32 : i32
    %1 = arith.extui %0 : i1 to i32
    %c0_i32_0 = arith.constant 0 : i32
    %2 = arith.cmpi ne, %1, %c0_i32_0 : i32
    scf.if %2 {
      %c0_18 = arith.constant 0 : index
      %c0_19 = arith.constant 0 : index
      %27 = vector.load %arg1[%c0_18, %c0_19] : memref<16x8xf32, #tpu.memory_space<vmem>>, vector<16x8xf32>
      %c0_20 = arith.constant 0 : index
      %c0_21 = arith.constant 0 : index
      %28 = vector.load %arg2[%c0_20, %c0_21] : memref<24x12xf32, #tpu.memory_space<vmem>>, vector<24x12xf32>
      %29 = tpu.iota {dimensions = array<i32: 1>} : vector<40x16xi32>
      %c0_22 = arith.constant 0 : index
      %c0_23 = arith.constant 0 : index
      %30 = vector.load %arg3[%c0_22, %c0_23] : memref<40x1xi32, #tpu.memory_space<vmem>>, vector<40x1xi32>
      %31 = vector.broadcast %30 : vector<40x1xi32> to vector<40x16xi32>
      %32 = arith.cmpi eq, %29, %31 : vector<40x16xi32>
      %cst_24 = arith.constant 1.000000e+00 : f32
      %cst_25 = arith.constant 0.000000e+00 : f32
      %33 = vector.broadcast %cst_24 : f32 to vector<40x16xf32>
      %34 = vector.broadcast %cst_25 : f32 to vector<40x16xf32>
      %35 = arith.select %32, %33, %34 : vector<40x16xi1>, vector<40x16xf32>
      %36 = tpu.iota {dimensions = array<i32: 0>} : vector<24x40xi32>
      %c0_26 = arith.constant 0 : index
      %c0_27 = arith.constant 0 : index
      %37 = vector.load %arg4[%c0_26, %c0_27] : memref<1x40xi32, #tpu.memory_space<vmem>>, vector<1x40xi32>
      %38 = vector.broadcast %37 : vector<1x40xi32> to vector<24x40xi32>
      %39 = arith.cmpi eq, %36, %38 : vector<24x40xi32>
      %cst_28 = arith.constant 1.000000e+00 : f32
      %cst_29 = arith.constant 0.000000e+00 : f32
      %40 = vector.broadcast %cst_28 : f32 to vector<24x40xf32>
      %41 = vector.broadcast %cst_29 : f32 to vector<24x40xf32>
      %42 = arith.select %39, %40, %41 : vector<24x40xi1>, vector<24x40xf32>
      %43 = tpu.iota {dimensions = array<i32: 1>} : vector<40x24xi32>
      %c0_30 = arith.constant 0 : index
      %c0_31 = arith.constant 0 : index
      %44 = vector.load %arg6[%c0_30, %c0_31] : memref<40x1xi32, #tpu.memory_space<vmem>>, vector<40x1xi32>
      %45 = vector.broadcast %44 : vector<40x1xi32> to vector<40x24xi32>
      %46 = arith.cmpi eq, %43, %45 : vector<40x24xi32>
      %cst_32 = arith.constant 1.000000e+00 : f32
      %cst_33 = arith.constant 0.000000e+00 : f32
      %47 = vector.broadcast %cst_32 : f32 to vector<40x24xf32>
      %48 = vector.broadcast %cst_33 : f32 to vector<40x24xf32>
      %49 = arith.select %46, %47, %48 : vector<40x24xi1>, vector<40x24xf32>
      %50 = tpu.iota {dimensions = array<i32: 0>} : vector<16x40xi32>
      %c0_34 = arith.constant 0 : index
      %c0_35 = arith.constant 0 : index
      %51 = vector.load %arg7[%c0_34, %c0_35] : memref<1x40xi32, #tpu.memory_space<vmem>>, vector<1x40xi32>
      %52 = vector.broadcast %51 : vector<1x40xi32> to vector<16x40xi32>
      %53 = arith.cmpi eq, %50, %52 : vector<16x40xi32>
      %cst_36 = arith.constant 1.000000e+00 : f32
      %cst_37 = arith.constant 0.000000e+00 : f32
      %54 = vector.broadcast %cst_36 : f32 to vector<16x40xf32>
      %55 = vector.broadcast %cst_37 : f32 to vector<16x40xf32>
      %56 = arith.select %53, %54, %55 : vector<16x40xi1>, vector<16x40xf32>
      %c0_38 = arith.constant 0 : index
      %c0_39 = arith.constant 0 : index
      %57 = vector.load %arg5[%c0_38, %c0_39] : memref<24x1xf32, #tpu.memory_space<vmem>>, vector<24x1xf32>
      %c0_40 = arith.constant 0 : index
      %c0_41 = arith.constant 0 : index
      %58 = vector.load %arg8[%c0_40, %c0_41] : memref<16x1xf32, #tpu.memory_space<vmem>>, vector<16x1xf32>
      %cst_42 = arith.constant dense<0.000000e+00> : vector<40x8xf32>
      %59 = tpu.matmul %35, %27, %cst_42 {dimension_numbers = #tpu.dot_dimension_numbers<[1], [0], [0], [1], [0, 0, 1, 1], [], []>} : vector<40x16xf32>, vector<16x8xf32>, vector<40x8xf32> -> vector<40x8xf32>
      %cst_43 = arith.constant dense<0.000000e+00> : vector<24x8xf32>
      %60 = tpu.matmul %42, %59, %cst_43 {dimension_numbers = #tpu.dot_dimension_numbers<[1], [0], [0], [1], [0, 0, 1, 1], [], []>} : vector<24x40xf32>, vector<40x8xf32>, vector<24x8xf32> -> vector<24x8xf32>
      %61 = vector.broadcast %57 : vector<24x1xf32> to vector<24x8xf32>
      %62 = arith.mulf %60, %61 : vector<24x8xf32>
      %c0_44 = arith.constant 0 : index
      %c0_45 = arith.constant 0 : index
      %63 = vector.load %arg9[%c0_44, %c0_45] : memref<8x32xf32, #tpu.memory_space<vmem>>, vector<8x32xf32>
      %cst_46 = arith.constant dense<0.000000e+00> : vector<24x32xf32>
      %64 = tpu.matmul %62, %63, %cst_46 {dimension_numbers = #tpu.dot_dimension_numbers<[1], [0], [0], [1], [0, 0, 1, 1], [], []>} : vector<24x8xf32>, vector<8x32xf32>, vector<24x32xf32> -> vector<24x32xf32>
      %c0_47 = arith.constant 0 : index
      %c0_48 = arith.constant 0 : index
      %65 = vector.load %arg10[%c0_47, %c0_48] : memref<12x32xf32, #tpu.memory_space<vmem>>, vector<12x32xf32>
      %cst_49 = arith.constant dense<0.000000e+00> : vector<24x32xf32>
      %66 = tpu.matmul %28, %65, %cst_49 {dimension_numbers = #tpu.dot_dimension_numbers<[1], [0], [0], [1], [0, 0, 1, 1], [], []>} : vector<24x12xf32>, vector<12x32xf32>, vector<24x32xf32> -> vector<24x32xf32>
      %67 = arith.addf %64, %66 : vector<24x32xf32>
      %c0_50 = arith.constant 0 : index
      %c0_51 = arith.constant 0 : index
      %68 = vector.load %arg11[%c0_50, %c0_51] : memref<1x32xf32, #tpu.memory_space<vmem>>, vector<1x32xf32>
      %69 = vector.broadcast %68 : vector<1x32xf32> to vector<24x32xf32>
      %70 = arith.addf %67, %69 : vector<24x32xf32>
      %cst_52 = arith.constant dense<0.000000e+00> : vector<40x12xf32>
      %71 = tpu.matmul %49, %28, %cst_52 {dimension_numbers = #tpu.dot_dimension_numbers<[1], [0], [0], [1], [0, 0, 1, 1], [], []>} : vector<40x24xf32>, vector<24x12xf32>, vector<40x12xf32> -> vector<40x12xf32>
      %cst_53 = arith.constant dense<0.000000e+00> : vector<16x12xf32>
      %72 = tpu.matmul %56, %71, %cst_53 {dimension_numbers = #tpu.dot_dimension_numbers<[1], [0], [0], [1], [0, 0, 1, 1], [], []>} : vector<16x40xf32>, vector<40x12xf32>, vector<16x12xf32> -> vector<16x12xf32>
      %73 = vector.broadcast %58 : vector<16x1xf32> to vector<16x12xf32>
      %74 = arith.mulf %72, %73 : vector<16x12xf32>
      %c0_54 = arith.constant 0 : index
      %c0_55 = arith.constant 0 : index
      %75 = vector.load %arg12[%c0_54, %c0_55] : memref<12x32xf32, #tpu.memory_space<vmem>>, vector<12x32xf32>
      %cst_56 = arith.constant dense<0.000000e+00> : vector<16x32xf32>
      %76 = tpu.matmul %74, %75, %cst_56 {dimension_numbers = #tpu.dot_dimension_numbers<[1], [0], [0], [1], [0, 0, 1, 1], [], []>} : vector<16x12xf32>, vector<12x32xf32>, vector<16x32xf32> -> vector<16x32xf32>
      %c0_57 = arith.constant 0 : index
      %c0_58 = arith.constant 0 : index
      %77 = vector.load %arg13[%c0_57, %c0_58] : memref<8x32xf32, #tpu.memory_space<vmem>>, vector<8x32xf32>
      %cst_59 = arith.constant dense<0.000000e+00> : vector<16x32xf32>
      %78 = tpu.matmul %27, %77, %cst_59 {dimension_numbers = #tpu.dot_dimension_numbers<[1], [0], [0], [1], [0, 0, 1, 1], [], []>} : vector<16x8xf32>, vector<8x32xf32>, vector<16x32xf32> -> vector<16x32xf32>
      %79 = arith.addf %76, %78 : vector<16x32xf32>
      %c0_60 = arith.constant 0 : index
      %c0_61 = arith.constant 0 : index
      %80 = vector.load %arg14[%c0_60, %c0_61] : memref<1x32xf32, #tpu.memory_space<vmem>>, vector<1x32xf32>
      %81 = vector.broadcast %80 : vector<1x32xf32> to vector<16x32xf32>
      %82 = arith.addf %79, %81 : vector<16x32xf32>
      %cst_62 = arith.constant 0.000000e+00 : f32
      %83 = vector.broadcast %cst_62 : f32 to vector<24x32xf32>
      %84 = arith.maximumf %70, %83 : vector<24x32xf32>
      %cst_63 = arith.constant 0.000000e+00 : f32
      %85 = vector.broadcast %cst_63 : f32 to vector<16x32xf32>
      %86 = arith.maximumf %82, %85 : vector<16x32xf32>
      %cst_64 = arith.constant dense<0.000000e+00> : vector<40x32xf32>
      %87 = tpu.matmul %35, %86, %cst_64 {dimension_numbers = #tpu.dot_dimension_numbers<[1], [0], [0], [1], [0, 0, 1, 1], [], []>} : vector<40x16xf32>, vector<16x32xf32>, vector<40x32xf32> -> vector<40x32xf32>
      %cst_65 = arith.constant dense<0.000000e+00> : vector<24x32xf32>
      %88 = tpu.matmul %42, %87, %cst_65 {dimension_numbers = #tpu.dot_dimension_numbers<[1], [0], [0], [1], [0, 0, 1, 1], [], []>} : vector<24x40xf32>, vector<40x32xf32>, vector<24x32xf32> -> vector<24x32xf32>
      %89 = vector.broadcast %57 : vector<24x1xf32> to vector<24x32xf32>
      %90 = arith.mulf %88, %89 : vector<24x32xf32>
      %c0_66 = arith.constant 0 : index
      %c0_67 = arith.constant 0 : index
      %91 = vector.load %arg15[%c0_66, %c0_67] : memref<32x32xf32, #tpu.memory_space<vmem>>, vector<32x32xf32>
      %cst_68 = arith.constant dense<0.000000e+00> : vector<24x32xf32>
      %92 = tpu.matmul %90, %91, %cst_68 {dimension_numbers = #tpu.dot_dimension_numbers<[1], [0], [0], [1], [0, 0, 1, 1], [], []>} : vector<24x32xf32>, vector<32x32xf32>, vector<24x32xf32> -> vector<24x32xf32>
      %c0_69 = arith.constant 0 : index
      %c0_70 = arith.constant 0 : index
      %93 = vector.load %arg16[%c0_69, %c0_70] : memref<32x32xf32, #tpu.memory_space<vmem>>, vector<32x32xf32>
      %cst_71 = arith.constant dense<0.000000e+00> : vector<24x32xf32>
      %94 = tpu.matmul %84, %93, %cst_71 {dimension_numbers = #tpu.dot_dimension_numbers<[1], [0], [0], [1], [0, 0, 1, 1], [], []>} : vector<24x32xf32>, vector<32x32xf32>, vector<24x32xf32> -> vector<24x32xf32>
      %95 = arith.addf %92, %94 : vector<24x32xf32>
      %c0_72 = arith.constant 0 : index
      %c0_73 = arith.constant 0 : index
      %96 = vector.load %arg17[%c0_72, %c0_73] : memref<1x32xf32, #tpu.memory_space<vmem>>, vector<1x32xf32>
      %97 = vector.broadcast %96 : vector<1x32xf32> to vector<24x32xf32>
      %98 = arith.addf %95, %97 : vector<24x32xf32>
      %cst_74 = arith.constant dense<0.000000e+00> : vector<40x32xf32>
      %99 = tpu.matmul %49, %84, %cst_74 {dimension_numbers = #tpu.dot_dimension_numbers<[1], [0], [0], [1], [0, 0, 1, 1], [], []>} : vector<40x24xf32>, vector<24x32xf32>, vector<40x32xf32> -> vector<40x32xf32>
      %cst_75 = arith.constant dense<0.000000e+00> : vector<16x32xf32>
      %100 = tpu.matmul %56, %99, %cst_75 {dimension_numbers = #tpu.dot_dimension_numbers<[1], [0], [0], [1], [0, 0, 1, 1], [], []>} : vector<16x40xf32>, vector<40x32xf32>, vector<16x32xf32> -> vector<16x32xf32>
      %101 = vector.broadcast %58 : vector<16x1xf32> to vector<16x32xf32>
      %102 = arith.mulf %100, %101 : vector<16x32xf32>
      %c0_76 = arith.constant 0 : index
      %c0_77 = arith.constant 0 : index
      %103 = vector.load %arg18[%c0_76, %c0_77] : memref<32x32xf32, #tpu.memory_space<vmem>>, vector<32x32xf32>
      %cst_78 = arith.constant dense<0.000000e+00> : vector<16x32xf32>
      %104 = tpu.matmul %102, %103, %cst_78 {dimension_numbers = #tpu.dot_dimension_numbers<[1], [0], [0], [1], [0, 0, 1, 1], [], []>} : vector<16x32xf32>, vector<32x32xf32>, vector<16x32xf32> -> vector<16x32xf32>
      %c0_79 = arith.constant 0 : index
      %c0_80 = arith.constant 0 : index
      %105 = vector.load %arg19[%c0_79, %c0_80] : memref<32x32xf32, #tpu.memory_space<vmem>>, vector<32x32xf32>
      %cst_81 = arith.constant dense<0.000000e+00> : vector<16x32xf32>
      %106 = tpu.matmul %86, %105, %cst_81 {dimension_numbers = #tpu.dot_dimension_numbers<[1], [0], [0], [1], [0, 0, 1, 1], [], []>} : vector<16x32xf32>, vector<32x32xf32>, vector<16x32xf32> -> vector<16x32xf32>
      %107 = arith.addf %104, %106 : vector<16x32xf32>
      %c0_82 = arith.constant 0 : index
      %c0_83 = arith.constant 0 : index
      %108 = vector.load %arg20[%c0_82, %c0_83] : memref<1x32xf32, #tpu.memory_space<vmem>>, vector<1x32xf32>
      %109 = vector.broadcast %108 : vector<1x32xf32> to vector<16x32xf32>
      %110 = arith.addf %107, %109 : vector<16x32xf32>
      %c0_84 = arith.constant 0 : index
      %c0_85 = arith.constant 0 : index
      %111 = vector.load %arg21[%c0_84, %c0_85] : memref<32x32xf32, #tpu.memory_space<vmem>>, vector<32x32xf32>
      %cst_86 = arith.constant dense<0.000000e+00> : vector<16x32xf32>
      %112 = tpu.matmul %110, %111, %cst_86 {dimension_numbers = #tpu.dot_dimension_numbers<[1], [0], [0], [1], [0, 0, 1, 1], [], []>} : vector<16x32xf32>, vector<32x32xf32>, vector<16x32xf32> -> vector<16x32xf32>
      %c0_87 = arith.constant 0 : index
      %c0_88 = arith.constant 0 : index
      %113 = vector.load %arg29[%c0_87, %c0_88] : memref<40x32xf32, #tpu.memory_space<vmem>>, vector<16x32xf32>
      tpu.vector_store %arg29[%c0_87, %c0_88], %112 {strides = array<i32>} : memref<40x32xf32, #tpu.memory_space<vmem>>, vector<16x32xf32>,
      %c0_89 = arith.constant 0 : index
      %c0_90 = arith.constant 0 : index
      %114 = vector.load %arg22[%c0_89, %c0_90] : memref<32x32xf32, #tpu.memory_space<vmem>>, vector<32x32xf32>
      %cst_91 = arith.constant dense<0.000000e+00> : vector<24x32xf32>
      %115 = tpu.matmul %98, %114, %cst_91 {dimension_numbers = #tpu.dot_dimension_numbers<[1], [0], [0], [1], [0, 0, 1, 1], [], []>} : vector<24x32xf32>, vector<32x32xf32>, vector<24x32xf32> -> vector<24x32xf32>
      %c16 = arith.constant 16 : index
      %c0_92 = arith.constant 0 : index
      %116 = vector.load %arg29[%c16, %c0_92] : memref<40x32xf32, #tpu.memory_space<vmem>>, vector<24x32xf32>
      tpu.vector_store %arg29[%c16, %c0_92], %115 {strides = array<i32>} : memref<40x32xf32, #tpu.memory_space<vmem>>, vector<24x32xf32>,
    } else {
    }
    %3 = tpu.iota {dimensions = array<i32: 1>} : vector<128x40xi32>
    %c0 = arith.constant 0 : index
    %c0_1 = arith.constant 0 : index
    %4 = vector.load %arg26[%c0, %c0_1] : memref<128x1xi32, #tpu.memory_space<vmem>>, vector<128x1xi32>
    %5 = vector.broadcast %4 : vector<128x1xi32> to vector<128x40xi32>
    %6 = arith.cmpi eq, %3, %5 : vector<128x40xi32>
    %c0_2 = arith.constant 0 : index
    %c0_3 = arith.constant 0 : index
    %7 = vector.load %arg27[%c0_2, %c0_3] : memref<128x1xi32, #tpu.memory_space<vmem>>, vector<128x1xi32>
    %8 = vector.broadcast %7 : vector<128x1xi32> to vector<128x40xi32>
    %9 = arith.cmpi eq, %3, %8 : vector<128x40xi32>
    %10 = arith.ori %6, %9 : vector<128x40xi1>
    %cst = arith.constant 1.000000e+00 : f32
    %cst_4 = arith.constant 0.000000e+00 : f32
    %11 = vector.broadcast %cst : f32 to vector<128x40xf32>
    %12 = vector.broadcast %cst_4 : f32 to vector<128x40xf32>
    %13 = arith.select %10, %11, %12 : vector<128x40xi1>, vector<128x40xf32>
    %c0_5 = arith.constant 0 : index
    %c0_6 = arith.constant 0 : index
    %14 = vector.load %arg29[%c0_5, %c0_6] : memref<40x32xf32, #tpu.memory_space<vmem>>, vector<40x32xf32>
    %cst_7 = arith.constant dense<0.000000e+00> : vector<128x32xf32>
    %15 = tpu.matmul %13, %14, %cst_7 {dimension_numbers = #tpu.dot_dimension_numbers<[1], [0], [0], [1], [0, 0, 1, 1], [], []>} : vector<128x40xf32>, vector<40x32xf32>, vector<128x32xf32> -> vector<128x32xf32>
    %c0_8 = arith.constant 0 : index
    %c0_9 = arith.constant 0 : index
    %16 = vector.load %arg23[%c0_8, %c0_9] : memref<1x32xf32, #tpu.memory_space<vmem>>, vector<1x32xf32>
    %17 = vector.broadcast %16 : vector<1x32xf32> to vector<128x32xf32>
    %18 = arith.addf %15, %17 : vector<128x32xf32>
    %cst_10 = arith.constant 0.000000e+00 : f32
    %19 = vector.broadcast %cst_10 : f32 to vector<128x32xf32>
    %20 = arith.maximumf %18, %19 : vector<128x32xf32>
    %c0_11 = arith.constant 0 : index
    %c0_12 = arith.constant 0 : index
    %21 = vector.load %arg24[%c0_11, %c0_12] : memref<1x32xf32, #tpu.memory_space<vmem>>, vector<1x32xf32>
    %cst_13 = arith.constant dense<0.000000e+00> : vector<1x128xf32>
    %22 = tpu.matmul %21, %20, %cst_13 {dimension_numbers = #tpu.dot_dimension_numbers<[1], [1], [0], [0], [0, 0, 1, 0], [], []>} : vector<1x32xf32>, vector<128x32xf32>, vector<1x128xf32> -> vector<1x128xf32>
    %c0_14 = arith.constant 0 : index
    %c0_15 = arith.constant 0 : index
    %23 = vector.load %arg25[%c0_14, %c0_15] : memref<1x1xf32, #tpu.memory_space<vmem>>, vector<1x1xf32>
    %24 = vector.broadcast %23 : vector<1x1xf32> to vector<1x128xf32>
    %25 = arith.addf %22, %24 : vector<1x128xf32>
    %c0_16 = arith.constant 0 : index
    %c0_17 = arith.constant 0 : index
    %26 = vector.load %arg28[%c0_16, %c0_17] : memref<1x128xf32, #tpu.memory_space<vmem>>, vector<1x128xf32>
    tpu.vector_store %arg28[%c0_16, %c0_17], %25 {strides = array<i32>} : memref<1x128xf32, #tpu.memory_space<vmem>>, vector<1x128xf32>,
    return
  }
  func.func @transform_0(%arg0: i32) -> (i32, i32) {
    %c0_i32 = arith.constant 0 : i32
    %c0_i32_0 = arith.constant 0 : i32
    %c0_i32_1 = arith.constant 0 : i32
    return %c0_i32, %c0_i32_0 : i32, i32
  }
  func.func @transform_1(%arg0: i32) -> (i32, i32) {
    %c0_i32 = arith.constant 0 : i32
    %c0_i32_0 = arith.constant 0 : i32
    %c0_i32_1 = arith.constant 0 : i32
    return %c0_i32, %c0_i32_0 : i32, i32
  }
  func.func @transform_2(%arg0: i32) -> (i32, i32) {
    %c0_i32 = arith.constant 0 : i32
    %c0_i32_0 = arith.constant 0 : i32
    %c0_i32_1 = arith.constant 0 : i32
    return %c0_i32, %c0_i32_0 : i32, i32
  }
  func.func @transform_3(%arg0: i32) -> (i32, i32) {
    %c0_i32 = arith.constant 0 : i32
    %c0_i32_0 = arith.constant 0 : i32
    %c0_i32_1 = arith.constant 0 : i32
    return %c0_i32, %c0_i32_0 : i32, i32
  }
  func.func @transform_4(%arg0: i32) -> (i32, i32) {
    %c0_i32 = arith.constant 0 : i32
    %c0_i32_0 = arith.constant 0 : i32
    %c0_i32_1 = arith.constant 0 : i32
    return %c0_i32, %c0_i32_0 : i32, i32
  }
  func.func @transform_5(%arg0: i32) -> (i32, i32) {
    %c0_i32 = arith.constant 0 : i32
    %c0_i32_0 = arith.constant 0 : i32
    %c0_i32_1 = arith.constant 0 : i32
    return %c0_i32, %c0_i32_0 : i32, i32
  }
  func.func @transform_6(%arg0: i32) -> (i32, i32) {
    %c0_i32 = arith.constant 0 : i32
    %c0_i32_0 = arith.constant 0 : i32
    %c0_i32_1 = arith.constant 0 : i32
    return %c0_i32, %c0_i32_0 : i32, i32
  }
  func.func @transform_7(%arg0: i32) -> (i32, i32) {
    %c0_i32 = arith.constant 0 : i32
    %c0_i32_0 = arith.constant 0 : i32
    %c0_i32_1 = arith.constant 0 : i32
    return %c0_i32, %c0_i32_0 : i32, i32
  }
  func.func @transform_8(%arg0: i32) -> (i32, i32) {
    %c0_i32 = arith.constant 0 : i32
    %c0_i32_0 = arith.constant 0 : i32
    %c0_i32_1 = arith.constant 0 : i32
    return %c0_i32, %c0_i32_0 : i32, i32
  }
  func.func @transform_9(%arg0: i32) -> (i32, i32) {
    %c0_i32 = arith.constant 0 : i32
    %c0_i32_0 = arith.constant 0 : i32
    %c0_i32_1 = arith.constant 0 : i32
    return %c0_i32, %c0_i32_0 : i32, i32
  }
  func.func @transform_10(%arg0: i32) -> (i32, i32) {
    %c0_i32 = arith.constant 0 : i32
    %c0_i32_0 = arith.constant 0 : i32
    %c0_i32_1 = arith.constant 0 : i32
    return %c0_i32, %c0_i32_0 : i32, i32
  }
  func.func @transform_11(%arg0: i32) -> (i32, i32) {
    %c0_i32 = arith.constant 0 : i32
    %c0_i32_0 = arith.constant 0 : i32
    %c0_i32_1 = arith.constant 0 : i32
    return %c0_i32, %c0_i32_0 : i32, i32
  }
  func.func @transform_12(%arg0: i32) -> (i32, i32) {
    %c0_i32 = arith.constant 0 : i32
    %c0_i32_0 = arith.constant 0 : i32
    %c0_i32_1 = arith.constant 0 : i32
    return %c0_i32, %c0_i32_0 : i32, i32
  }
  func.func @transform_13(%arg0: i32) -> (i32, i32) {
    %c0_i32 = arith.constant 0 : i32
    %c0_i32_0 = arith.constant 0 : i32
    %c0_i32_1 = arith.constant 0 : i32
    return %c0_i32, %c0_i32_0 : i32, i32
  }
  func.func @transform_14(%arg0: i32) -> (i32, i32) {
    %c0_i32 = arith.constant 0 : i32
    %c0_i32_0 = arith.constant 0 : i32
    %c0_i32_1 = arith.constant 0 : i32
    return %c0_i32, %c0_i32_0 : i32, i32
  }
  func.func @transform_15(%arg0: i32) -> (i32, i32) {
    %c0_i32 = arith.constant 0 : i32
    %c0_i32_0 = arith.constant 0 : i32
    %c0_i32_1 = arith.constant 0 : i32
    return %c0_i32, %c0_i32_0 : i32, i32
  }
  func.func @transform_16(%arg0: i32) -> (i32, i32) {
    %c0_i32 = arith.constant 0 : i32
    %c0_i32_0 = arith.constant 0 : i32
    %c0_i32_1 = arith.constant 0 : i32
    return %c0_i32, %c0_i32_0 : i32, i32
  }
  func.func @transform_17(%arg0: i32) -> (i32, i32) {
    %c0_i32 = arith.constant 0 : i32
    %c0_i32_0 = arith.constant 0 : i32
    %c0_i32_1 = arith.constant 0 : i32
    return %c0_i32, %c0_i32_0 : i32, i32
  }
  func.func @transform_18(%arg0: i32) -> (i32, i32) {
    %c0_i32 = arith.constant 0 : i32
    %c0_i32_0 = arith.constant 0 : i32
    %c0_i32_1 = arith.constant 0 : i32
    return %c0_i32, %c0_i32_0 : i32, i32
  }
  func.func @transform_19(%arg0: i32) -> (i32, i32) {
    %c0_i32 = arith.constant 0 : i32
    %c0_i32_0 = arith.constant 0 : i32
    %c0_i32_1 = arith.constant 0 : i32
    return %c0_i32, %c0_i32_0 : i32, i32
  }
  func.func @transform_20(%arg0: i32) -> (i32, i32) {
    %c0_i32 = arith.constant 0 : i32
    %c0_i32_0 = arith.constant 0 : i32
    %c0_i32_1 = arith.constant 0 : i32
    return %c0_i32, %c0_i32_0 : i32, i32
  }
  func.func @transform_21(%arg0: i32) -> (i32, i32) {
    %c0_i32 = arith.constant 0 : i32
    %c0_i32_0 = arith.constant 0 : i32
    %c0_i32_1 = arith.constant 0 : i32
    return %c0_i32, %c0_i32_0 : i32, i32
  }
  func.func @transform_22(%arg0: i32) -> (i32, i32) {
    %c0_i32 = arith.constant 0 : i32
    %c0_i32_0 = arith.constant 0 : i32
    %c0_i32_1 = arith.constant 0 : i32
    return %c0_i32, %c0_i32_0 : i32, i32
  }
  func.func @transform_23(%arg0: i32) -> (i32, i32) {
    %c0_i32 = arith.constant 0 : i32
    %c0_i32_0 = arith.constant 0 : i32
    %c0_i32_1 = arith.constant 0 : i32
    return %c0_i32, %c0_i32_0 : i32, i32
  }
  func.func @transform_24(%arg0: i32) -> (i32, i32) {
    %c0_i32 = arith.constant 0 : i32
    %c0_i32_0 = arith.constant 0 : i32
    %c0_i32_1 = arith.constant 0 : i32
    return %c0_i32, %c0_i32_0 : i32, i32
  }
  func.func @transform_25(%arg0: i32) -> (i32, i32) {
    %c0_i32 = arith.constant 0 : i32
    %c0_i32_0 = arith.constant 0 : i32
    return %arg0, %c0_i32 : i32, i32
  }
  func.func @transform_26(%arg0: i32) -> (i32, i32) {
    %c0_i32 = arith.constant 0 : i32
    %c0_i32_0 = arith.constant 0 : i32
    return %arg0, %c0_i32 : i32, i32
  }
  func.func @transform_27(%arg0: i32) -> (i32, i32) {
    %c0_i32 = arith.constant 0 : i32
    %c0_i32_0 = arith.constant 0 : i32
    return %arg0, %c0_i32 : i32, i32
  }
}

</mosaic_0001>

<llo_original>
// kernel: tpu_custom_call.1
$region0: #{tpu_custom_call.1}
  #allocation0 [shape = 'u32[]', space=smem, size = 0x4, offset = 0x4, fixed_abs, tag = 'smem constant byte address 0x4 - core index']
  #allocation1 [shape = 'u32[144,128]{1,0:T(1,128)}', space=vmem, size = 0x12000, scoped, tag = 'internal scratch']
  #allocation2 [shape = 'f32[40,32]{1,0:T(8,128)}', space=vmem, size = 0x5000, scoped, tag = 'scratch operand']
  #allocation3 [shape = 'f32[1,1]{1,0:T(1,128)S(1)}', space=vmem, size = 0x200, scoped, tag = 'scoped memory for tpu_custom_call.1']
  %s0 = inlined_call_operand.vmem [shape: f32[16,8], index: 0, kind: input, shape index: {}]
  %s1 = inlined_call_operand.vmem [shape: f32[24,12], index: 1, kind: input, shape index: {}]
  %s2 = inlined_call_operand.vmem [shape: s32[40,1], index: 2, kind: input, shape index: {}]
  %s3 = inlined_call_operand.vmem [shape: s32[1,40], index: 3, kind: input, shape index: {}]
  %s4 = inlined_call_operand.vmem [shape: f32[24,1], index: 4, kind: input, shape index: {}]
  %s5 = inlined_call_operand.vmem [shape: s32[40,1], index: 5, kind: input, shape index: {}]
  %s6 = inlined_call_operand.vmem [shape: s32[1,40], index: 6, kind: input, shape index: {}]
  %s7 = inlined_call_operand.vmem [shape: f32[16,1], index: 7, kind: input, shape index: {}]
  %s8 = inlined_call_operand.vmem [shape: f32[8,32], index: 8, kind: input, shape index: {}]
  %s9 = inlined_call_operand.vmem [shape: f32[12,32], index: 9, kind: input, shape index: {}]
  %s10 = inlined_call_operand.vmem [shape: f32[1,32], index: 10, kind: input, shape index: {}]
  %s11 = inlined_call_operand.vmem [shape: f32[12,32], index: 11, kind: input, shape index: {}]
  %s12 = inlined_call_operand.vmem [shape: f32[8,32], index: 12, kind: input, shape index: {}]
  %s13 = inlined_call_operand.vmem [shape: f32[1,32], index: 13, kind: input, shape index: {}]
  %s14 = inlined_call_operand.vmem [shape: f32[32,32], index: 14, kind: input, shape index: {}]
  %s15 = inlined_call_operand.vmem [shape: f32[32,32], index: 15, kind: input, shape index: {}]
  %s16 = inlined_call_operand.vmem [shape: f32[1,32], index: 16, kind: input, shape index: {}]
  %s17 = inlined_call_operand.vmem [shape: f32[32,32], index: 17, kind: input, shape index: {}]
  %s18 = inlined_call_operand.vmem [shape: f32[32,32], index: 18, kind: input, shape index: {}]
  %s19 = inlined_call_operand.vmem [shape: f32[1,32], index: 19, kind: input, shape index: {}]
  %s20 = inlined_call_operand.vmem [shape: f32[32,32], index: 20, kind: input, shape index: {}]
  %s21 = inlined_call_operand.vmem [shape: f32[32,32], index: 21, kind: input, shape index: {}]
  %s22 = inlined_call_operand.vmem [shape: f32[1,32], index: 22, kind: input, shape index: {}]
  %s23 = inlined_call_operand.vmem [shape: f32[1,32], index: 23, kind: input, shape index: {}]
  %s24 = inlined_call_operand.<no memory space> [shape: f32[1,1], index: 24, kind: input, shape index: {}]
  %s25 = inlined_call_operand.vmem [shape: s32[128,1], index: 25, kind: input, shape index: {}]
  %s26 = inlined_call_operand.vmem [shape: s32[128,1], index: 26, kind: input, shape index: {}]
  %s27 = inlined_call_operand.hbm [shape: f32[1,128], index: 27, kind: output, shape index: {}]
  %s28 = sld [smem:[#allocation0]]
  $region122: #{tpu_custom_call.1} parent=0
    _
  %s30 = ssub.s32 1, %s28
  %s31 = scalar_select 0, %s30, %s28
  %v32 = vstv %s24
  %33 = vst [vmem:[#allocation3] sm:$0x1] %v32
  $region1: #{tpu_custom_call.1} parent=0
    #allocation4 [shape = 'u8[512]{0}', space=vmem, size = 0x400, scoped, tag = 'output window, operand 0, single buffered']
    #allocation5 [shape = 's32[1]{0}', space=sflag, size = 0x4, scoped, tag = 'scoped memory for tpu_custom_call.1']
    %34 = vsyncpa [#allocation5], 0
    // Predicated region
    $region2: #{tpu_custom_call.1} parent=1 // pred_check
      _
    $region3: #{tpu_custom_call.1} parent=1 // pred_check_branch
      %36 = sbr.rel (0) target = $region5
    $region4: #{tpu_custom_call.1} parent=1 // pred_region
      _
    $region5: #{tpu_custom_call.1} parent=1 // pred_fallthru
      _
    // Predicated region
    $region6: #{tpu_custom_call.1} parent=1 // pred_check
      _
    $region7: #{tpu_custom_call.1} parent=1 // pred_check_branch
      %38 = sbr.rel (0) target = $region9
    $region8: #{tpu_custom_call.1} parent=1 // pred_region
      _
    $region9: #{tpu_custom_call.1} parent=1 // pred_fallthru
      _
    // Predicated region
    $region10: #{tpu_custom_call.1} parent=1 // pred_check
      _
    $region11: #{tpu_custom_call.1} parent=1 // pred_check_branch
      %40 = sbr.rel (0) target = $region13
    $region12: #{tpu_custom_call.1} parent=1 // pred_region
      _
    $region13: #{tpu_custom_call.1} parent=1 // pred_fallthru
      _
    // Predicated region
    $region14: #{tpu_custom_call.1} parent=1 // pred_check
      _
    $region15: #{tpu_custom_call.1} parent=1 // pred_check_branch
      %42 = sbr.rel (0) target = $region17
    $region16: #{tpu_custom_call.1} parent=1 // pred_region
      _
    $region17: #{tpu_custom_call.1} parent=1 // pred_fallthru
      _
    // Predicated region
    $region18: #{tpu_custom_call.1} parent=1 // pred_check
      _
    $region19: #{tpu_custom_call.1} parent=1 // pred_check_branch
      %44 = sbr.rel (0) target = $region21
    $region20: #{tpu_custom_call.1} parent=1 // pred_region
      _
    $region21: #{tpu_custom_call.1} parent=1 // pred_fallthru
      _
    // Predicated region
    $region22: #{tpu_custom_call.1} parent=1 // pred_check
      _
    $region23: #{tpu_custom_call.1} parent=1 // pred_check_branch
      %46 = sbr.rel (0) target = $region25
    $region24: #{tpu_custom_call.1} parent=1 // pred_region
      _
    $region25: #{tpu_custom_call.1} parent=1 // pred_fallthru
      _
    // Predicated region
    $region26: #{tpu_custom_call.1} parent=1 // pred_check
      _
    $region27: #{tpu_custom_call.1} parent=1 // pred_check_branch
      %48 = sbr.rel (0) target = $region29
    $region28: #{tpu_custom_call.1} parent=1 // pred_region
      _
    $region29: #{tpu_custom_call.1} parent=1 // pred_fallthru
      _
    // Predicated region
    $region30: #{tpu_custom_call.1} parent=1 // pred_check
      _
    $region31: #{tpu_custom_call.1} parent=1 // pred_check_branch
      %50 = sbr.rel (0) target = $region33
    $region32: #{tpu_custom_call.1} parent=1 // pred_region
      _
    $region33: #{tpu_custom_call.1} parent=1 // pred_fallthru
      _
    // Predicated region
    $region34: #{tpu_custom_call.1} parent=1 // pred_check
      _
    $region35: #{tpu_custom_call.1} parent=1 // pred_check_branch
      %52 = sbr.rel (0) target = $region37
    $region36: #{tpu_custom_call.1} parent=1 // pred_region
      _
    $region37: #{tpu_custom_call.1} parent=1 // pred_fallthru
      _
    // Predicated region
    $region38: #{tpu_custom_call.1} parent=1 // pred_check
      _
    $region39: #{tpu_custom_call.1} parent=1 // pred_check_branch
      %54 = sbr.rel (0) target = $region41
    $region40: #{tpu_custom_call.1} parent=1 // pred_region
      _
    $region41: #{tpu_custom_call.1} parent=1 // pred_fallthru
      _
    // Predicated region
    $region42: #{tpu_custom_call.1} parent=1 // pred_check
      _
    $region43: #{tpu_custom_call.1} parent=1 // pred_check_branch
      %56 = sbr.rel (0) target = $region45
    $region44: #{tpu_custom_call.1} parent=1 // pred_region
      _
    $region45: #{tpu_custom_call.1} parent=1 // pred_fallthru
      _
    // Predicated region
    $region46: #{tpu_custom_call.1} parent=1 // pred_check
      _
    $region47: #{tpu_custom_call.1} parent=1 // pred_check_branch
      %58 = sbr.rel (0) target = $region49
    $region48: #{tpu_custom_call.1} parent=1 // pred_region
      _
    $region49: #{tpu_custom_call.1} parent=1 // pred_fallthru
      _
    // Predicated region
    $region50: #{tpu_custom_call.1} parent=1 // pred_check
      _
    $region51: #{tpu_custom_call.1} parent=1 // pred_check_branch
      %60 = sbr.rel (0) target = $region53
    $region52: #{tpu_custom_call.1} parent=1 // pred_region
      _
    $region53: #{tpu_custom_call.1} parent=1 // pred_fallthru
      _
    // Predicated region
    $region54: #{tpu_custom_call.1} parent=1 // pred_check
      _
    $region55: #{tpu_custom_call.1} parent=1 // pred_check_branch
      %62 = sbr.rel (0) target = $region57
    $region56: #{tpu_custom_call.1} parent=1 // pred_region
      _
    $region57: #{tpu_custom_call.1} parent=1 // pred_fallthru
      _
    // Predicated region
    $region58: #{tpu_custom_call.1} parent=1 // pred_check
      _
    $region59: #{tpu_custom_call.1} parent=1 // pred_check_branch
      %64 = sbr.rel (0) target = $region61
    $region60: #{tpu_custom_call.1} parent=1 // pred_region
      _
    $region61: #{tpu_custom_call.1} parent=1 // pred_fallthru
      _
    // Predicated region
    $region62: #{tpu_custom_call.1} parent=1 // pred_check
      _
    $region63: #{tpu_custom_call.1} parent=1 // pred_check_branch
      %66 = sbr.rel (0) target = $region65
    $region64: #{tpu_custom_call.1} parent=1 // pred_region
      _
    $region65: #{tpu_custom_call.1} parent=1 // pred_fallthru
      _
    // Predicated region
    $region66: #{tpu_custom_call.1} parent=1 // pred_check
      _
    $region67: #{tpu_custom_call.1} parent=1 // pred_check_branch
      %68 = sbr.rel (0) target = $region69
    $region68: #{tpu_custom_call.1} parent=1 // pred_region
      _
    $region69: #{tpu_custom_call.1} parent=1 // pred_fallthru
      _
    // Predicated region
    $region70: #{tpu_custom_call.1} parent=1 // pred_check
      _
    $region71: #{tpu_custom_call.1} parent=1 // pred_check_branch
      %70 = sbr.rel (0) target = $region73
    $region72: #{tpu_custom_call.1} parent=1 // pred_region
      _
    $region73: #{tpu_custom_call.1} parent=1 // pred_fallthru
      _
    // Predicated region
    $region74: #{tpu_custom_call.1} parent=1 // pred_check
      _
    $region75: #{tpu_custom_call.1} parent=1 // pred_check_branch
      %72 = sbr.rel (0) target = $region77
    $region76: #{tpu_custom_call.1} parent=1 // pred_region
      _
    $region77: #{tpu_custom_call.1} parent=1 // pred_fallthru
      _
    // Predicated region
    $region78: #{tpu_custom_call.1} parent=1 // pred_check
      _
    $region79: #{tpu_custom_call.1} parent=1 // pred_check_branch
      %74 = sbr.rel (0) target = $region81
    $region80: #{tpu_custom_call.1} parent=1 // pred_region
      _
    $region81: #{tpu_custom_call.1} parent=1 // pred_fallthru
      _
    // Predicated region
    $region82: #{tpu_custom_call.1} parent=1 // pred_check
      _
    $region83: #{tpu_custom_call.1} parent=1 // pred_check_branch
      %76 = sbr.rel (0) target = $region85
    $region84: #{tpu_custom_call.1} parent=1 // pred_region
      _
    $region85: #{tpu_custom_call.1} parent=1 // pred_fallthru
      _
    // Predicated region
    $region86: #{tpu_custom_call.1} parent=1 // pred_check
      _
    $region87: #{tpu_custom_call.1} parent=1 // pred_check_branch
      %78 = sbr.rel (0) target = $region89
    $region88: #{tpu_custom_call.1} parent=1 // pred_region
      _
    $region89: #{tpu_custom_call.1} parent=1 // pred_fallthru
      _
    // Predicated region
    $region90: #{tpu_custom_call.1} parent=1 // pred_check
      _
    $region91: #{tpu_custom_call.1} parent=1 // pred_check_branch
      %80 = sbr.rel (0) target = $region93
    $region92: #{tpu_custom_call.1} parent=1 // pred_region
      _
    $region93: #{tpu_custom_call.1} parent=1 // pred_fallthru
      _
    // Predicated region
    $region94: #{tpu_custom_call.1} parent=1 // pred_check
      _
    $region95: #{tpu_custom_call.1} parent=1 // pred_check_branch
      %82 = sbr.rel (0) target = $region97
    $region96: #{tpu_custom_call.1} parent=1 // pred_region
      _
    $region97: #{tpu_custom_call.1} parent=1 // pred_fallthru
      _
    // Predicated region
    $region98: #{tpu_custom_call.1} parent=1 // pred_check
      _
    $region99: #{tpu_custom_call.1} parent=1 // pred_check_branch
      %84 = sbr.rel (0) target = $region101
    $region100: #{tpu_custom_call.1} parent=1 // pred_region
      _
    $region101: #{tpu_custom_call.1} parent=1 // pred_fallthru
      _
    // Predicated region
    $region102: #{tpu_custom_call.1} parent=1 // pred_check
      _
    $region103: #{tpu_custom_call.1} parent=1 // pred_check_branch
      %86 = sbr.rel (0) target = $region105
    $region104: #{tpu_custom_call.1} parent=1 // pred_region
      _
    $region105: #{tpu_custom_call.1} parent=1 // pred_fallthru
      _
    // Predicated region
    $region106: #{tpu_custom_call.1} parent=1 // pred_check
      _
    $region107: #{tpu_custom_call.1} parent=1 // pred_check_branch
      %88 = sbr.rel (0) target = $region109
    $region108: #{tpu_custom_call.1} parent=1 // pred_region
      _
    $region109: #{tpu_custom_call.1} parent=1 // pred_fallthru
      _
    %p89 = scmp.eq.s32.totalorder 0, 0
    // Predicated region
    $region110: #{tpu_custom_call.1} parent=1 // pred_check
      %p90 = pneg %p89
    $region111: #{tpu_custom_call.1} parent=1 // pred_check_branch
      %92 = sbr.rel (%p90) target = $region113
    $region112: #{tpu_custom_call.1} parent=1 // pred_region
      %v93 = vld [vmem:[%s0] sm:$0xff]
      %v94 = vld [vmem:[%s0 + $0x8] sm:$0xff]
      %v95 = vld [vmem:[%s1] sm:$0xff]
      %v96 = vld [vmem:[%s1 + $0x8] sm:$0xff]
      %v97 = vld [vmem:[%s1 + $0x10] sm:$0xff]
      %v98 = vlaneseq
      %v99 = vand.u32 %v98, 127
      %v100 = vld [vmem:[%s2] sm:$0xff]
      %v101 = vld [vmem:[%s2 + $0x8] sm:$0xff]
      %v102 = vld [vmem:[%s2 + $0x10] sm:$0xff]
      %v103 = vld [vmem:[%s2 + $0x18] sm:$0xff]
      %v104 = vld [vmem:[%s2 + $0x20] sm:$0xff]
      %105 = vset.pattern.permute.xlu0 0
      %106 = vperm.xlu0 %105, %v100
      %v107 = vpop.permute.xlu0 %106
      %108 = vset.pattern.permute.xlu0 0
      %109 = vperm.xlu0 %108, %v101
      %v110 = vpop.permute.xlu0 %109
      %111 = vset.pattern.permute.xlu0 0
      %112 = vperm.xlu0 %111, %v102
      %v113 = vpop.permute.xlu0 %112
      %114 = vset.pattern.permute.xlu0 0
      %115 = vperm.xlu0 %114, %v103
      %v116 = vpop.permute.xlu0 %115
      %117 = vset.pattern.permute.xlu0 0
      %118 = vperm.xlu0 %117, %v104
      %v119 = vpop.permute.xlu0 %118
      %vm120 = vcmp.eq.s32.totalorder %v99, %v107
      %vm121 = vcmp.eq.s32.totalorder %v99, %v110
      %vm122 = vcmp.eq.s32.totalorder %v99, %v113
      %vm123 = vcmp.eq.s32.totalorder %v99, %v116
      %vm124 = vcmp.eq.s32.totalorder %v99, %v119
      %v125 = vsel %vm120, 1.0, 0.0
      %v126 = vsel %vm121, 1.0, 0.0
      %v127 = vsel %vm122, 1.0, 0.0
      %v128 = vsel %vm123, 1.0, 0.0
      %v129 = vsel %vm124, 1.0, 0.0
      %v130 = vlaneseq
      %v131 = vshrl.u32 %v130, 7
      %v132 = vadd.s32 %v131, 8
      %v133 = vadd.s32 %v131, 16
      %v134 = vld [vmem:[%s3] sm:$0x1]
      %v135 = vlaneseq
      %v136 = vshrl.u32 %v135, 7
      %v137 = vsub.s32 0, %v136
      %v138 = vrot.slane %v134, %v137
      %vm139 = vcmp.eq.s32.totalorder %v131, %v138
      %vm140 = vcmp.eq.s32.totalorder %v132, %v138
      %vm141 = vcmp.eq.s32.totalorder %v133, %v138
      %v142 = vsel %vm139, 1.0, 0.0
      %v143 = vsel %vm140, 1.0, 0.0
      %v144 = vsel %vm141, 1.0, 0.0
      %v145 = vld [vmem:[%s5] sm:$0xff]
      %v146 = vld [vmem:[%s5 + $0x8] sm:$0xff]
      %v147 = vld [vmem:[%s5 + $0x10] sm:$0xff]
      %v148 = vld [vmem:[%s5 + $0x18] sm:$0xff]
      %v149 = vld [vmem:[%s5 + $0x20] sm:$0xff]
      %150 = vset.pattern.permute.xlu0 0
      %151 = vperm.xlu0 %150, %v145
      %v152 = vpop.permute.xlu0 %151
      %153 = vset.pattern.permute.xlu0 0
      %154 = vperm.xlu0 %153, %v146
      %v155 = vpop.permute.xlu0 %154
      %156 = vset.pattern.permute.xlu0 0
      %157 = vperm.xlu0 %156, %v147
      %v158 = vpop.permute.xlu0 %157
      %159 = vset.pattern.permute.xlu0 0
      %160 = vperm.xlu0 %159, %v148
      %v161 = vpop.permute.xlu0 %160
      %162 = vset.pattern.permute.xlu0 0
      %163 = vperm.xlu0 %162, %v149
      %v164 = vpop.permute.xlu0 %163
      %vm165 = vcmp.eq.s32.totalorder %v99, %v152
      %vm166 = vcmp.eq.s32.totalorder %v99, %v155
      %vm167 = vcmp.eq.s32.totalorder %v99, %v158
      %vm168 = vcmp.eq.s32.totalorder %v99, %v161
      %vm169 = vcmp.eq.s32.totalorder %v99, %v164
      %v170 = vsel %vm165, 1.0, 0.0
      %v171 = vsel %vm166, 1.0, 0.0
      %v172 = vsel %vm167, 1.0, 0.0
      %v173 = vsel %vm168, 1.0, 0.0
      %v174 = vsel %vm169, 1.0, 0.0
      %v175 = vld [vmem:[%s6] sm:$0x1]
      %v176 = vlaneseq
      %v177 = vshrl.u32 %v176, 7
      %v178 = vsub.s32 0, %v177
      %v179 = vrot.slane %v175, %v178
      %vm180 = vcmp.eq.s32.totalorder %v131, %v179
      %vm181 = vcmp.eq.s32.totalorder %v132, %v179
      %v182 = vsel %vm180, 1.0, 0.0
      %v183 = vsel %vm181, 1.0, 0.0
      %v184 = vld [vmem:[%s4] sm:$0xff]
      %v185 = vld [vmem:[%s4 + $0x8] sm:$0xff]
      %v186 = vld [vmem:[%s4 + $0x10] sm:$0xff]
      %v187 = vld [vmem:[%s7] sm:$0xff]
      %v188 = vld [vmem:[%s7 + $0x8] sm:$0xff]
      %vm189 = vcmask 130048
      %v191 = vsel %vm189, %v125, 0
      %v194 = vsel %vm189, %v126, 0
      %v197 = vsel %vm189, %v127, 0
      %v200 = vsel %vm189, %v128, 0
      %v203 = vsel %vm189, %v129, 0
      %205 = vmatprep.subr.mxu0 0.0
      %206 = vmatpush1.msra.mxu0 %v93
      %207 = vmatprep.subr.mxu0 0.0
      %208 = vmatpush1.msra.mxu0 %v94
      %209 = vmatprep.subr.mxu0 0.0
      %210 = vmatpush1.msra.mxu0 0.0
      %211 = vmatprep.subr.mxu0 0.0
      %212 = vmatpush1.msra.mxu0 0.0
      %213 = vmatprep.subr.mxu0 0.0
      %214 = vmatpush1.msra.mxu0 0.0
      %215 = vmatprep.subr.mxu0 0.0
      %216 = vmatpush1.msra.mxu0 0.0
      %217 = vmatprep.subr.mxu0 0.0
      %218 = vmatpush1.msra.mxu0 0.0
      %219 = vmatprep.subr.mxu0 0.0
      %220 = vmatpush1.msra.mxu0 0.0
      %221 = vmatprep.subr.mxu0 0.0
      %222 = vmatpush1.msra.mxu0 0.0
      %223 = vmatprep.subr.mxu0 0.0
      %224 = vmatpush1.msra.mxu0 0.0
      %225 = vmatprep.subr.mxu0 0.0
      %226 = vmatpush1.msra.mxu0 0.0
      %227 = vmatprep.subr.mxu0 0.0
      %228 = vmatpush1.msra.mxu0 0.0
      %229 = vmatprep.subr.mxu0 0.0
      %230 = vmatpush1.msra.mxu0 0.0
      %231 = vmatprep.subr.mxu0 0.0
      %232 = vmatpush1.msra.mxu0 0.0
      %233 = vmatprep.subr.mxu0 0.0
      %234 = vmatpush1.msra.mxu0 0.0
      %235 = vmatprep.subr.mxu0 0.0
      %236 = vmatpush1.msra.mxu0 0.0
      %237 = vmatprep.subr.mxu0 0.0
      %238 = vmatpush1.msra.mxu0 0.0
      %239 = vmatprep.subr.mxu0 0.0
      %240 = vmatpush1.msra.mxu0 0.0
      %241 = vmatprep.subr.mxu0 0.0
      %242 = vmatpush1.msra.mxu0 0.0
      %243 = vmatprep.subr.mxu0 0.0
      %244 = vmatpush1.msra.mxu0 0.0
      %245 = vmatprep.subr.mxu0 0.0
      %246 = vmatpush1.msra.mxu0 0.0
      %247 = vmatprep.subr.mxu0 0.0
      %248 = vmatpush1.msra.mxu0 0.0
      %249 = vmatprep.subr.mxu0 0.0
      %250 = vmatpush1.msra.mxu0 0.0
      %251 = vmatprep.subr.mxu0 0.0
      %252 = vmatpush1.msra.mxu0 0.0
      %253 = vmatprep.subr.mxu0 0.0
      %254 = vmatpush1.msra.mxu0 0.0
      %255 = vmatprep.subr.mxu0 0.0
      %256 = vmatpush1.msra.mxu0 0.0
      %257 = vmatprep.subr.mxu0 0.0
      %258 = vmatpush1.msra.mxu0 0.0
      %259 = vmatprep.subr.mxu0 0.0
      %260 = vmatpush1.msra.mxu0 0.0
      %261 = vmatprep.subr.mxu0 0.0
      %262 = vmatpush1.msra.mxu0 0.0
      %263 = vmatprep.subr.mxu0 0.0
      %264 = vmatpush1.msra.mxu0 0.0
      %265 = vmatprep.subr.mxu0 0.0
      %266 = vmatpush1.msra.mxu0 0.0
      %267 = vmatprep.subr.mxu0 0.0
      %268 = vmatpush1.msra.mxu0 0.0
      %269 = vmatprep.mubr.f32.mxu0 0.0
      %270 = vmatmul.mubr.f32.gmra.mrb[0].mxu0 %v191
      %v271 = vpop.f32.mrb[0].mxu0
      %v272 = vadd.f32 0.0, %v271
      %v273 = vpop.f32.mrb[0].mxu0
      %274 = vmatprep.mubr.f32.mxu0 0.0
      %275 = vmatmul.mubr.f32.gmra.mrb[0].mxu0 %v194
      %v276 = vpop.f32.mrb[0].mxu0
      %v277 = vadd.f32 0.0, %v276
      %v278 = vpop.f32.mrb[0].mxu0
      %279 = vmatprep.mubr.f32.mxu0 0.0
      %280 = vmatmul.mubr.f32.gmra.mrb[0].mxu0 %v197
      %v281 = vpop.f32.mrb[0].mxu0
      %v282 = vadd.f32 0.0, %v281
      %v283 = vpop.f32.mrb[0].mxu0
      %284 = vmatprep.mubr.f32.mxu0 0.0
      %285 = vmatmul.mubr.f32.gmra.mrb[0].mxu0 %v200
      %v286 = vpop.f32.mrb[0].mxu0
      %v287 = vadd.f32 0.0, %v286
      %v288 = vpop.f32.mrb[0].mxu0
      %289 = vmatprep.mubr.f32.mxu0 0.0
      %290 = vmatmul.mubr.f32.gmra.mrb[0].mxu0 %v203
      %v291 = vpop.f32.mrb[0].mxu0
      %v292 = vadd.f32 0.0, %v291
      %v293 = vpop.f32.mrb[0].mxu0
      %294 = vdwg.mxu0
      %vm295 = vcmask 326656
      %v297 = vsel %vm295, %v142, 0
      %v300 = vsel %vm295, %v143, 0
      %v303 = vsel %vm295, %v144, 0
      %305 = vmatprep.subr.mxu0 0.0
      %306 = vmatpush1.msra.mxu0 %v272
      %307 = vmatprep.subr.mxu0 0.0
      %308 = vmatpush1.msra.mxu0 %v277
      %309 = vmatprep.subr.mxu0 0.0
      %310 = vmatpush1.msra.mxu0 %v282
      %311 = vmatprep.subr.mxu0 0.0
      %312 = vmatpush1.msra.mxu0 %v287
      %313 = vmatprep.subr.mxu0 0.0
      %314 = vmatpush1.msra.mxu0 %v292
      %315 = vmatprep.subr.mxu0 0.0
      %316 = vmatpush1.msra.mxu0 0.0
      %317 = vmatprep.subr.mxu0 0.0
      %318 = vmatpush1.msra.mxu0 0.0
      %319 = vmatprep.subr.mxu0 0.0
      %320 = vmatpush1.msra.mxu0 0.0
      %321 = vmatprep.subr.mxu0 0.0
      %322 = vmatpush1.msra.mxu0 0.0
      %323 = vmatprep.subr.mxu0 0.0
      %324 = vmatpush1.msra.mxu0 0.0
      %325 = vmatprep.subr.mxu0 0.0
      %326 = vmatpush1.msra.mxu0 0.0
      %327 = vmatprep.subr.mxu0 0.0
      %328 = vmatpush1.msra.mxu0 0.0
      %329 = vmatprep.subr.mxu0 0.0
      %330 = vmatpush1.msra.mxu0 0.0
      %331 = vmatprep.subr.mxu0 0.0
      %332 = vmatpush1.msra.mxu0 0.0
      %333 = vmatprep.subr.mxu0 0.0
      %334 = vmatpush1.msra.mxu0 0.0
      %335 = vmatprep.subr.mxu0 0.0
      %336 = vmatpush1.msra.mxu0 0.0
      %337 = vmatprep.subr.mxu0 0.0
      %338 = vmatpush1.msra.mxu0 0.0
      %339 = vmatprep.subr.mxu0 0.0
      %340 = vmatpush1.msra.mxu0 0.0
      %341 = vmatprep.subr.mxu0 0.0
      %342 = vmatpush1.msra.mxu0 0.0
      %343 = vmatprep.subr.mxu0 0.0
      %344 = vmatpush1.msra.mxu0 0.0
      %345 = vmatprep.subr.mxu0 0.0
      %346 = vmatpush1.msra.mxu0 0.0
      %347 = vmatprep.subr.mxu0 0.0
      %348 = vmatpush1.msra.mxu0 0.0
      %349 = vmatprep.subr.mxu0 0.0
      %350 = vmatpush1.msra.mxu0 0.0
      %351 = vmatprep.subr.mxu0 0.0
      %352 = vmatpush1.msra.mxu0 0.0
      %353 = vmatprep.subr.mxu0 0.0
      %354 = vmatpush1.msra.mxu0 0.0
      %355 = vmatprep.subr.mxu0 0.0
      %356 = vmatpush1.msra.mxu0 0.0
      %357 = vmatprep.subr.mxu0 0.0
      %358 = vmatpush1.msra.mxu0 0.0
      %359 = vmatprep.subr.mxu0 0.0
      %360 = vmatpush1.msra.mxu0 0.0
      %361 = vmatprep.subr.mxu0 0.0
      %362 = vmatpush1.msra.mxu0 0.0
      %363 = vmatprep.subr.mxu0 0.0
      %364 = vmatpush1.msra.mxu0 0.0
      %365 = vmatprep.subr.mxu0 0.0
      %366 = vmatpush1.msra.mxu0 0.0
      %367 = vmatprep.subr.mxu0 0.0
      %368 = vmatpush1.msra.mxu0 0.0
      %369 = vmatprep.mubr.f32.mxu0 0.0
      %370 = vmatmul.mubr.f32.gmra.mrb[0].mxu0 %v297
      %v371 = vpop.f32.mrb[0].mxu0
      %v372 = vadd.f32 0.0, %v371
      %v373 = vpop.f32.mrb[0].mxu0
      %374 = vmatprep.mubr.f32.mxu0 0.0
      %375 = vmatmul.mubr.f32.gmra.mrb[0].mxu0 %v300
      %v376 = vpop.f32.mrb[0].mxu0
      %v377 = vadd.f32 0.0, %v376
      %v378 = vpop.f32.mrb[0].mxu0
      %379 = vmatprep.mubr.f32.mxu0 0.0
      %380 = vmatmul.mubr.f32.gmra.mrb[0].mxu0 %v303
      %v381 = vpop.f32.mrb[0].mxu0
      %v382 = vadd.f32 0.0, %v381
      %v383 = vpop.f32.mrb[0].mxu0
      %384 = vdwg.mxu0
      %386 = vset.pattern.permute.xlu0 0
      %387 = vperm.xlu0 %386, %v184
      %v388 = vpop.permute.xlu0 %387
      %391 = vset.pattern.permute.xlu0 0
      %392 = vperm.xlu0 %391, %v185
      %v393 = vpop.permute.xlu0 %392
      %396 = vset.pattern.permute.xlu0 0
      %397 = vperm.xlu0 %396, %v186
      %v398 = vpop.permute.xlu0 %397
      %v400 = vmul.f32 %v372, %v388
      %v401 = vmul.f32 %v377, %v393
      %v402 = vmul.f32 %v382, %v398
      %v403 = vld [vmem:[%s8] sm:$0xff]
      %v404 = vld [vmem:[%s9] sm:$0xff]
      %v405 = vld [vmem:[%s9 + $0x8] sm:$0xf]
      %vm406 = vcmask 97280
      %v408 = vsel %vm406, %v95, 0
      %v411 = vsel %vm406, %v96, 0
      %v414 = vsel %vm406, %v97, 0
      %vm416 = vcmask 1043456
      %v418 = vsel %vm416, %v405, 0
      %420 = vmatprep.subr.mxu0 0.0
      %421 = vmatpush1.msra.mxu0 %v404
      %422 = vmatprep.subr.mxu0 0.0
      %423 = vmatpush1.msra.mxu0 %v418
      %424 = vmatprep.subr.mxu0 0.0
      %425 = vmatpush1.msra.mxu0 0.0
      %426 = vmatprep.subr.mxu0 0.0
      %427 = vmatpush1.msra.mxu0 0.0
      %428 = vmatprep.subr.mxu0 0.0
      %429 = vmatpush1.msra.mxu0 0.0
      %430 = vmatprep.subr.mxu0 0.0
      %431 = vmatpush1.msra.mxu0 0.0
      %432 = vmatprep.subr.mxu0 0.0
      %433 = vmatpush1.msra.mxu0 0.0
      %434 = vmatprep.subr.mxu0 0.0
      %435 = vmatpush1.msra.mxu0 0.0
      %436 = vmatprep.subr.mxu0 0.0
      %437 = vmatpush1.msra.mxu0 0.0
      %438 = vmatprep.subr.mxu0 0.0
      %439 = vmatpush1.msra.mxu0 0.0
      %440 = vmatprep.subr.mxu0 0.0
      %441 = vmatpush1.msra.mxu0 0.0
      %442 = vmatprep.subr.mxu0 0.0
      %443 = vmatpush1.msra.mxu0 0.0
      %444 = vmatprep.subr.mxu0 0.0
      %445 = vmatpush1.msra.mxu0 0.0
      %446 = vmatprep.subr.mxu0 0.0
      %447 = vmatpush1.msra.mxu0 0.0
      %448 = vmatprep.subr.mxu0 0.0
      %449 = vmatpush1.msra.mxu0 0.0
      %450 = vmatprep.subr.mxu0 0.0
      %451 = vmatpush1.msra.mxu0 0.0
      %452 = vmatprep.subr.mxu0 0.0
      %453 = vmatpush1.msra.mxu0 0.0
      %454 = vmatprep.subr.mxu0 0.0
      %455 = vmatpush1.msra.mxu0 0.0
      %456 = vmatprep.subr.mxu0 0.0
      %457 = vmatpush1.msra.mxu0 0.0
      %458 = vmatprep.subr.mxu0 0.0
      %459 = vmatpush1.msra.mxu0 0.0
      %460 = vmatprep.subr.mxu0 0.0
      %461 = vmatpush1.msra.mxu0 0.0
      %462 = vmatprep.subr.mxu0 0.0
      %463 = vmatpush1.msra.mxu0 0.0
      %464 = vmatprep.subr.mxu0 0.0
      %465 = vmatpush1.msra.mxu0 0.0
      %466 = vmatprep.subr.mxu0 0.0
      %467 = vmatpush1.msra.mxu0 0.0
      %468 = vmatprep.subr.mxu0 0.0
      %469 = vmatpush1.msra.mxu0 0.0
      %470 = vmatprep.subr.mxu0 0.0
      %471 = vmatpush1.msra.mxu0 0.0
      %472 = vmatprep.subr.mxu0 0.0
      %473 = vmatpush1.msra.mxu0 0.0
      %474 = vmatprep.subr.mxu0 0.0
      %475 = vmatpush1.msra.mxu0 0.0
      %476 = vmatprep.subr.mxu0 0.0
      %477 = vmatpush1.msra.mxu0 0.0
      %478 = vmatprep.subr.mxu0 0.0
      %479 = vmatpush1.msra.mxu0 0.0
      %480 = vmatprep.subr.mxu0 0.0
      %481 = vmatpush1.msra.mxu0 0.0
      %482 = vmatprep.subr.mxu0 0.0
      %483 = vmatpush1.msra.mxu0 0.0
      %484 = vmatprep.mubr.f32.mxu0 0.0
      %485 = vmatmul.mubr.f32.gmra.mrb[0].mxu0 %v408
      %v486 = vpop.f32.mrb[0].mxu0
      %v487 = vadd.f32 0.0, %v486
      %v488 = vpop.f32.mrb[0].mxu0
      %489 = vmatprep.mubr.f32.mxu0 0.0
      %490 = vmatmul.mubr.f32.gmra.mrb[0].mxu0 %v411
      %v491 = vpop.f32.mrb[0].mxu0
      %v492 = vadd.f32 0.0, %v491
      %v493 = vpop.f32.mrb[0].mxu0
      %494 = vmatprep.mubr.f32.mxu0 0.0
      %495 = vmatmul.mubr.f32.gmra.mrb[0].mxu0 %v414
      %v496 = vpop.f32.mrb[0].mxu0
      %v497 = vadd.f32 0.0, %v496
      %v498 = vpop.f32.mrb[0].mxu0
      %499 = vdwg.mxu0
      %vm500 = vcmask 64512
      %v502 = vsel %vm500, %v400, 0
      %v505 = vsel %vm500, %v401, 0
      %v508 = vsel %vm500, %v402, 0
      %510 = vmatprep.subr.mxu0 0.0
      %511 = vmatpush1.msra.mxu0 %v403
      %512 = vmatprep.subr.mxu0 0.0
      %513 = vmatpush1.msra.mxu0 0.0
      %514 = vmatprep.subr.mxu0 0.0
      %515 = vmatpush1.msra.mxu0 0.0
      %516 = vmatprep.subr.mxu0 0.0
      %517 = vmatpush1.msra.mxu0 0.0
      %518 = vmatprep.subr.mxu0 0.0
      %519 = vmatpush1.msra.mxu0 0.0
      %520 = vmatprep.subr.mxu0 0.0
      %521 = vmatpush1.msra.mxu0 0.0
      %522 = vmatprep.subr.mxu0 0.0
      %523 = vmatpush1.msra.mxu0 0.0
      %524 = vmatprep.subr.mxu0 0.0
      %525 = vmatpush1.msra.mxu0 0.0
      %526 = vmatprep.subr.mxu0 0.0
      %527 = vmatpush1.msra.mxu0 0.0
      %528 = vmatprep.subr.mxu0 0.0
      %529 = vmatpush1.msra.mxu0 0.0
      %530 = vmatprep.subr.mxu0 0.0
      %531 = vmatpush1.msra.mxu0 0.0
      %532 = vmatprep.subr.mxu0 0.0
      %533 = vmatpush1.msra.mxu0 0.0
      %534 = vmatprep.subr.mxu0 0.0
      %535 = vmatpush1.msra.mxu0 0.0
      %536 = vmatprep.subr.mxu0 0.0
      %537 = vmatpush1.msra.mxu0 0.0
      %538 = vmatprep.subr.mxu0 0.0
      %539 = vmatpush1.msra.mxu0 0.0
      %540 = vmatprep.subr.mxu0 0.0
      %541 = vmatpush1.msra.mxu0 0.0
      %542 = vmatprep.subr.mxu0 0.0
      %543 = vmatpush1.msra.mxu0 0.0
      %544 = vmatprep.subr.mxu0 0.0
      %545 = vmatpush1.msra.mxu0 0.0
      %546 = vmatprep.subr.mxu0 0.0
      %547 = vmatpush1.msra.mxu0 0.0
      %548 = vmatprep.subr.mxu0 0.0
      %549 = vmatpush1.msra.mxu0 0.0
      %550 = vmatprep.subr.mxu0 0.0
      %551 = vmatpush1.msra.mxu0 0.0
      %552 = vmatprep.subr.mxu0 0.0
      %553 = vmatpush1.msra.mxu0 0.0
      %554 = vmatprep.subr.mxu0 0.0
      %555 = vmatpush1.msra.mxu0 0.0
      %556 = vmatprep.subr.mxu0 0.0
      %557 = vmatpush1.msra.mxu0 0.0
      %558 = vmatprep.subr.mxu0 0.0
      %559 = vmatpush1.msra.mxu0 0.0
      %560 = vmatprep.subr.mxu0 0.0
      %561 = vmatpush1.msra.mxu0 0.0
      %562 = vmatprep.subr.mxu0 0.0
      %563 = vmatpush1.msra.mxu0 0.0
      %564 = vmatprep.subr.mxu0 0.0
      %565 = vmatpush1.msra.mxu0 0.0
      %566 = vmatprep.subr.mxu0 0.0
      %567 = vmatpush1.msra.mxu0 0.0
      %568 = vmatprep.subr.mxu0 0.0
      %569 = vmatpush1.msra.mxu0 0.0
      %570 = vmatprep.subr.mxu0 0.0
      %571 = vmatpush1.msra.mxu0 0.0
      %572 = vmatprep.subr.mxu0 0.0
      %573 = vmatpush1.msra.mxu0 0.0
      %574 = vmatprep.mubr.f32.mxu0 0.0
      %575 = vmatmul.mubr.f32.gmra.mrb[0].mxu0 %v502
      %v576 = vpop.f32.mrb[0].mxu0
      %v577 = vadd.f32 %v487, %v576
      %v578 = vpop.f32.mrb[0].mxu0
      %579 = vmatprep.mubr.f32.mxu0 0.0
      %580 = vmatmul.mubr.f32.gmra.mrb[0].mxu0 %v505
      %v581 = vpop.f32.mrb[0].mxu0
      %v582 = vadd.f32 %v492, %v581
      %v583 = vpop.f32.mrb[0].mxu0
      %584 = vmatprep.mubr.f32.mxu0 0.0
      %585 = vmatmul.mubr.f32.gmra.mrb[0].mxu0 %v508
      %v586 = vpop.f32.mrb[0].mxu0
      %v587 = vadd.f32 %v497, %v586
      %v588 = vpop.f32.mrb[0].mxu0
      %589 = vdwg.mxu0
      %v590 = vld [vmem:[%s10] sm:$0x1]
      %v592 = vlaneseq
      %v593 = vshrl.u32 %v592, 7
      %v594 = vsub.s32 0, %v593
      %v595 = vrot.slane %v590, %v594
      %v597 = vadd.f32 %v577, %v595
      %v598 = vadd.f32 %v582, %v595
      %v599 = vadd.f32 %v587, %v595
      %vm600 = vcmask 195584
      %v602 = vsel %vm600, %v170, 0
      %v605 = vsel %vm600, %v171, 0
      %v608 = vsel %vm600, %v172, 0
      %v611 = vsel %vm600, %v173, 0
      %v614 = vsel %vm600, %v174, 0
      %616 = vmatprep.subr.mxu0 0.0
      %617 = vmatpush1.msra.mxu0 %v95
      %618 = vmatprep.subr.mxu0 0.0
      %619 = vmatpush1.msra.mxu0 %v96
      %620 = vmatprep.subr.mxu0 0.0
      %621 = vmatpush1.msra.mxu0 %v97
      %622 = vmatprep.subr.mxu0 0.0
      %623 = vmatpush1.msra.mxu0 0.0
      %624 = vmatprep.subr.mxu0 0.0
      %625 = vmatpush1.msra.mxu0 0.0
      %626 = vmatprep.subr.mxu0 0.0
      %627 = vmatpush1.msra.mxu0 0.0
      %628 = vmatprep.subr.mxu0 0.0
      %629 = vmatpush1.msra.mxu0 0.0
      %630 = vmatprep.subr.mxu0 0.0
      %631 = vmatpush1.msra.mxu0 0.0
      %632 = vmatprep.subr.mxu0 0.0
      %633 = vmatpush1.msra.mxu0 0.0
      %634 = vmatprep.subr.mxu0 0.0
      %635 = vmatpush1.msra.mxu0 0.0
      %636 = vmatprep.subr.mxu0 0.0
      %637 = vmatpush1.msra.mxu0 0.0
      %638 = vmatprep.subr.mxu0 0.0
      %639 = vmatpush1.msra.mxu0 0.0
      %640 = vmatprep.subr.mxu0 0.0
      %641 = vmatpush1.msra.mxu0 0.0
      %642 = vmatprep.subr.mxu0 0.0
      %643 = vmatpush1.msra.mxu0 0.0
      %644 = vmatprep.subr.mxu0 0.0
      %645 = vmatpush1.msra.mxu0 0.0
      %646 = vmatprep.subr.mxu0 0.0
      %647 = vmatpush1.msra.mxu0 0.0
      %648 = vmatprep.subr.mxu0 0.0
      %649 = vmatpush1.msra.mxu0 0.0
      %650 = vmatprep.subr.mxu0 0.0
      %651 = vmatpush1.msra.mxu0 0.0
      %652 = vmatprep.subr.mxu0 0.0
      %653 = vmatpush1.msra.mxu0 0.0
      %654 = vmatprep.subr.mxu0 0.0
      %655 = vmatpush1.msra.mxu0 0.0
      %656 = vmatprep.subr.mxu0 0.0
      %657 = vmatpush1.msra.mxu0 0.0
      %658 = vmatprep.subr.mxu0 0.0
      %659 = vmatpush1.msra.mxu0 0.0
      %660 = vmatprep.subr.mxu0 0.0
      %661 = vmatpush1.msra.mxu0 0.0
      %662 = vmatprep.subr.mxu0 0.0
      %663 = vmatpush1.msra.mxu0 0.0
      %664 = vmatprep.subr.mxu0 0.0
      %665 = vmatpush1.msra.mxu0 0.0
      %666 = vmatprep.subr.mxu0 0.0
      %667 = vmatpush1.msra.mxu0 0.0
      %668 = vmatprep.subr.mxu0 0.0
      %669 = vmatpush1.msra.mxu0 0.0
      %670 = vmatprep.subr.mxu0 0.0
      %671 = vmatpush1.msra.mxu0 0.0
      %672 = vmatprep.subr.mxu0 0.0
      %673 = vmatpush1.msra.mxu0 0.0
      %674 = vmatprep.subr.mxu0 0.0
      %675 = vmatpush1.msra.mxu0 0.0
      %676 = vmatprep.subr.mxu0 0.0
      %677 = vmatpush1.msra.mxu0 0.0
      %678 = vmatprep.subr.mxu0 0.0
      %679 = vmatpush1.msra.mxu0 0.0
      %680 = vmatprep.mubr.f32.mxu0 0.0
      %681 = vmatmul.mubr.f32.gmra.mrb[0].mxu0 %v602
      %v682 = vpop.f32.mrb[0].mxu0
      %v683 = vadd.f32 0.0, %v682
      %v684 = vpop.f32.mrb[0].mxu0
      %685 = vmatprep.mubr.f32.mxu0 0.0
      %686 = vmatmul.mubr.f32.gmra.mrb[0].mxu0 %v605
      %v687 = vpop.f32.mrb[0].mxu0
      %v688 = vadd.f32 0.0, %v687
      %v689 = vpop.f32.mrb[0].mxu0
      %690 = vmatprep.mubr.f32.mxu0 0.0
      %691 = vmatmul.mubr.f32.gmra.mrb[0].mxu0 %v608
      %v692 = vpop.f32.mrb[0].mxu0
      %v693 = vadd.f32 0.0, %v692
      %v694 = vpop.f32.mrb[0].mxu0
      %695 = vmatprep.mubr.f32.mxu0 0.0
      %696 = vmatmul.mubr.f32.gmra.mrb[0].mxu0 %v611
      %v697 = vpop.f32.mrb[0].mxu0
      %v698 = vadd.f32 0.0, %v697
      %v699 = vpop.f32.mrb[0].mxu0
      %700 = vmatprep.mubr.f32.mxu0 0.0
      %701 = vmatmul.mubr.f32.gmra.mrb[0].mxu0 %v614
      %v702 = vpop.f32.mrb[0].mxu0
      %v703 = vadd.f32 0.0, %v702
      %v704 = vpop.f32.mrb[0].mxu0
      %705 = vdwg.mxu0
      %v707 = vsel %vm295, %v182, 0
      %v710 = vsel %vm295, %v183, 0
      %712 = vmatprep.subr.mxu0 0.0
      %713 = vmatpush1.msra.mxu0 %v683
      %714 = vmatprep.subr.mxu0 0.0
      %715 = vmatpush1.msra.mxu0 %v688
      %716 = vmatprep.subr.mxu0 0.0
      %717 = vmatpush1.msra.mxu0 %v693
      %718 = vmatprep.subr.mxu0 0.0
      %719 = vmatpush1.msra.mxu0 %v698
      %720 = vmatprep.subr.mxu0 0.0
      %721 = vmatpush1.msra.mxu0 %v703
      %722 = vmatprep.subr.mxu0 0.0
      %723 = vmatpush1.msra.mxu0 0.0
      %724 = vmatprep.subr.mxu0 0.0
      %725 = vmatpush1.msra.mxu0 0.0
      %726 = vmatprep.subr.mxu0 0.0
      %727 = vmatpush1.msra.mxu0 0.0
      %728 = vmatprep.subr.mxu0 0.0
      %729 = vmatpush1.msra.mxu0 0.0
      %730 = vmatprep.subr.mxu0 0.0
      %731 = vmatpush1.msra.mxu0 0.0
      %732 = vmatprep.subr.mxu0 0.0
      %733 = vmatpush1.msra.mxu0 0.0
      %734 = vmatprep.subr.mxu0 0.0
      %735 = vmatpush1.msra.mxu0 0.0
      %736 = vmatprep.subr.mxu0 0.0
      %737 = vmatpush1.msra.mxu0 0.0
      %738 = vmatprep.subr.mxu0 0.0
      %739 = vmatpush1.msra.mxu0 0.0
      %740 = vmatprep.subr.mxu0 0.0
      %741 = vmatpush1.msra.mxu0 0.0
      %742 = vmatprep.subr.mxu0 0.0
      %743 = vmatpush1.msra.mxu0 0.0
      %744 = vmatprep.subr.mxu0 0.0
      %745 = vmatpush1.msra.mxu0 0.0
      %746 = vmatprep.subr.mxu0 0.0
      %747 = vmatpush1.msra.mxu0 0.0
      %748 = vmatprep.subr.mxu0 0.0
      %749 = vmatpush1.msra.mxu0 0.0
      %750 = vmatprep.subr.mxu0 0.0
      %751 = vmatpush1.msra.mxu0 0.0
      %752 = vmatprep.subr.mxu0 0.0
      %753 = vmatpush1.msra.mxu0 0.0
      %754 = vmatprep.subr.mxu0 0.0
      %755 = vmatpush1.msra.mxu0 0.0
      %756 = vmatprep.subr.mxu0 0.0
      %757 = vmatpush1.msra.mxu0 0.0
      %758 = vmatprep.subr.mxu0 0.0
      %759 = vmatpush1.msra.mxu0 0.0
      %760 = vmatprep.subr.mxu0 0.0
      %761 = vmatpush1.msra.mxu0 0.0
      %762 = vmatprep.subr.mxu0 0.0
      %763 = vmatpush1.msra.mxu0 0.0
      %764 = vmatprep.subr.mxu0 0.0
      %765 = vmatpush1.msra.mxu0 0.0
      %766 = vmatprep.subr.mxu0 0.0
      %767 = vmatpush1.msra.mxu0 0.0
      %768 = vmatprep.subr.mxu0 0.0
      %769 = vmatpush1.msra.mxu0 0.0
      %770 = vmatprep.subr.mxu0 0.0
      %771 = vmatpush1.msra.mxu0 0.0
      %772 = vmatprep.subr.mxu0 0.0
      %773 = vmatpush1.msra.mxu0 0.0
      %774 = vmatprep.subr.mxu0 0.0
      %775 = vmatpush1.msra.mxu0 0.0
      %776 = vmatprep.mubr.f32.mxu0 0.0
      %777 = vmatmul.mubr.f32.gmra.mrb[0].mxu0 %v707
      %v778 = vpop.f32.mrb[0].mxu0
      %v779 = vadd.f32 0.0, %v778
      %v780 = vpop.f32.mrb[0].mxu0
      %781 = vmatprep.mubr.f32.mxu0 0.0
      %782 = vmatmul.mubr.f32.gmra.mrb[0].mxu0 %v710
      %v783 = vpop.f32.mrb[0].mxu0
      %v784 = vadd.f32 0.0, %v783
      %v785 = vpop.f32.mrb[0].mxu0
      %786 = vdwg.mxu0
      %788 = vset.pattern.permute.xlu0 0
      %789 = vperm.xlu0 %788, %v187
      %v790 = vpop.permute.xlu0 %789
      %793 = vset.pattern.permute.xlu0 0
      %794 = vperm.xlu0 %793, %v188
      %v795 = vpop.permute.xlu0 %794
      %v797 = vmul.f32 %v779, %v790
      %v798 = vmul.f32 %v784, %v795
      %v799 = vld [vmem:[%s11] sm:$0xff]
      %v800 = vld [vmem:[%s11 + $0x8] sm:$0xf]
      %v801 = vld [vmem:[%s12] sm:$0xff]
      %v803 = vsel %vm500, %v93, 0
      %v806 = vsel %vm500, %v94, 0
      %808 = vmatprep.subr.mxu0 0.0
      %809 = vmatpush1.msra.mxu0 %v801
      %810 = vmatprep.subr.mxu0 0.0
      %811 = vmatpush1.msra.mxu0 0.0
      %812 = vmatprep.subr.mxu0 0.0
      %813 = vmatpush1.msra.mxu0 0.0
      %814 = vmatprep.subr.mxu0 0.0
      %815 = vmatpush1.msra.mxu0 0.0
      %816 = vmatprep.subr.mxu0 0.0
      %817 = vmatpush1.msra.mxu0 0.0
      %818 = vmatprep.subr.mxu0 0.0
      %819 = vmatpush1.msra.mxu0 0.0
      %820 = vmatprep.subr.mxu0 0.0
      %821 = vmatpush1.msra.mxu0 0.0
      %822 = vmatprep.subr.mxu0 0.0
      %823 = vmatpush1.msra.mxu0 0.0
      %824 = vmatprep.subr.mxu0 0.0
      %825 = vmatpush1.msra.mxu0 0.0
      %826 = vmatprep.subr.mxu0 0.0
      %827 = vmatpush1.msra.mxu0 0.0
      %828 = vmatprep.subr.mxu0 0.0
      %829 = vmatpush1.msra.mxu0 0.0
      %830 = vmatprep.subr.mxu0 0.0
      %831 = vmatpush1.msra.mxu0 0.0
      %832 = vmatprep.subr.mxu0 0.0
      %833 = vmatpush1.msra.mxu0 0.0
      %834 = vmatprep.subr.mxu0 0.0
      %835 = vmatpush1.msra.mxu0 0.0
      %836 = vmatprep.subr.mxu0 0.0
      %837 = vmatpush1.msra.mxu0 0.0
      %838 = vmatprep.subr.mxu0 0.0
      %839 = vmatpush1.msra.mxu0 0.0
      %840 = vmatprep.subr.mxu0 0.0
      %841 = vmatpush1.msra.mxu0 0.0
      %842 = vmatprep.subr.mxu0 0.0
      %843 = vmatpush1.msra.mxu0 0.0
      %844 = vmatprep.subr.mxu0 0.0
      %845 = vmatpush1.msra.mxu0 0.0
      %846 = vmatprep.subr.mxu0 0.0
      %847 = vmatpush1.msra.mxu0 0.0
      %848 = vmatprep.subr.mxu0 0.0
      %849 = vmatpush1.msra.mxu0 0.0
      %850 = vmatprep.subr.mxu0 0.0
      %851 = vmatpush1.msra.mxu0 0.0
      %852 = vmatprep.subr.mxu0 0.0
      %853 = vmatpush1.msra.mxu0 0.0
      %854 = vmatprep.subr.mxu0 0.0
      %855 = vmatpush1.msra.mxu0 0.0
      %856 = vmatprep.subr.mxu0 0.0
      %857 = vmatpush1.msra.mxu0 0.0
      %858 = vmatprep.subr.mxu0 0.0
      %859 = vmatpush1.msra.mxu0 0.0
      %860 = vmatprep.subr.mxu0 0.0
      %861 = vmatpush1.msra.mxu0 0.0
      %862 = vmatprep.subr.mxu0 0.0
      %863 = vmatpush1.msra.mxu0 0.0
      %864 = vmatprep.subr.mxu0 0.0
      %865 = vmatpush1.msra.mxu0 0.0
      %866 = vmatprep.subr.mxu0 0.0
      %867 = vmatpush1.msra.mxu0 0.0
      %868 = vmatprep.subr.mxu0 0.0
      %869 = vmatpush1.msra.mxu0 0.0
      %870 = vmatprep.subr.mxu0 0.0
      %871 = vmatpush1.msra.mxu0 0.0
      %872 = vmatprep.mubr.f32.mxu0 0.0
      %873 = vmatmul.mubr.f32.gmra.mrb[0].mxu0 %v803
      %v874 = vpop.f32.mrb[0].mxu0
      %v875 = vadd.f32 0.0, %v874
      %v876 = vpop.f32.mrb[0].mxu0
      %877 = vmatprep.mubr.f32.mxu0 0.0
      %878 = vmatmul.mubr.f32.gmra.mrb[0].mxu0 %v806
      %v879 = vpop.f32.mrb[0].mxu0
      %v880 = vadd.f32 0.0, %v879
      %v881 = vpop.f32.mrb[0].mxu0
      %882 = vdwg.mxu0
      %v884 = vsel %vm406, %v797, 0
      %v887 = vsel %vm406, %v798, 0
      %v890 = vsel %vm416, %v800, 0
      %892 = vmatprep.subr.mxu0 0.0
      %893 = vmatpush1.msra.mxu0 %v799
      %894 = vmatprep.subr.mxu0 0.0
      %895 = vmatpush1.msra.mxu0 %v890
      %896 = vmatprep.subr.mxu0 0.0
      %897 = vmatpush1.msra.mxu0 0.0
      %898 = vmatprep.subr.mxu0 0.0
      %899 = vmatpush1.msra.mxu0 0.0
      %900 = vmatprep.subr.mxu0 0.0
      %901 = vmatpush1.msra.mxu0 0.0
      %902 = vmatprep.subr.mxu0 0.0
      %903 = vmatpush1.msra.mxu0 0.0
      %904 = vmatprep.subr.mxu0 0.0
      %905 = vmatpush1.msra.mxu0 0.0
      %906 = vmatprep.subr.mxu0 0.0
      %907 = vmatpush1.msra.mxu0 0.0
      %908 = vmatprep.subr.mxu0 0.0
      %909 = vmatpush1.msra.mxu0 0.0
      %910 = vmatprep.subr.mxu0 0.0
      %911 = vmatpush1.msra.mxu0 0.0
      %912 = vmatprep.subr.mxu0 0.0
      %913 = vmatpush1.msra.mxu0 0.0
      %914 = vmatprep.subr.mxu0 0.0
      %915 = vmatpush1.msra.mxu0 0.0
      %916 = vmatprep.subr.mxu0 0.0
      %917 = vmatpush1.msra.mxu0 0.0
      %918 = vmatprep.subr.mxu0 0.0
      %919 = vmatpush1.msra.mxu0 0.0
      %920 = vmatprep.subr.mxu0 0.0
      %921 = vmatpush1.msra.mxu0 0.0
      %922 = vmatprep.subr.mxu0 0.0
      %923 = vmatpush1.msra.mxu0 0.0
      %924 = vmatprep.subr.mxu0 0.0
      %925 = vmatpush1.msra.mxu0 0.0
      %926 = vmatprep.subr.mxu0 0.0
      %927 = vmatpush1.msra.mxu0 0.0
      %928 = vmatprep.subr.mxu0 0.0
      %929 = vmatpush1.msra.mxu0 0.0
      %930 = vmatprep.subr.mxu0 0.0
      %931 = vmatpush1.msra.mxu0 0.0
      %932 = vmatprep.subr.mxu0 0.0
      %933 = vmatpush1.msra.mxu0 0.0
      %934 = vmatprep.subr.mxu0 0.0
      %935 = vmatpush1.msra.mxu0 0.0
      %936 = vmatprep.subr.mxu0 0.0
      %937 = vmatpush1.msra.mxu0 0.0
      %938 = vmatprep.subr.mxu0 0.0
      %939 = vmatpush1.msra.mxu0 0.0
      %940 = vmatprep.subr.mxu0 0.0
      %941 = vmatpush1.msra.mxu0 0.0
      %942 = vmatprep.subr.mxu0 0.0
      %943 = vmatpush1.msra.mxu0 0.0
      %944 = vmatprep.subr.mxu0 0.0
      %945 = vmatpush1.msra.mxu0 0.0
      %946 = vmatprep.subr.mxu0 0.0
      %947 = vmatpush1.msra.mxu0 0.0
      %948 = vmatprep.subr.mxu0 0.0
      %949 = vmatpush1.msra.mxu0 0.0
      %950 = vmatprep.subr.mxu0 0.0
      %951 = vmatpush1.msra.mxu0 0.0
      %952 = vmatprep.subr.mxu0 0.0
      %953 = vmatpush1.msra.mxu0 0.0
      %954 = vmatprep.subr.mxu0 0.0
      %955 = vmatpush1.msra.mxu0 0.0
      %956 = vmatprep.mubr.f32.mxu0 0.0
      %957 = vmatmul.mubr.f32.gmra.mrb[0].mxu0 %v884
      %v958 = vpop.f32.mrb[0].mxu0
      %v959 = vadd.f32 %v875, %v958
      %v960 = vpop.f32.mrb[0].mxu0
      %961 = vmatprep.mubr.f32.mxu0 0.0
      %962 = vmatmul.mubr.f32.gmra.mrb[0].mxu0 %v887
      %v963 = vpop.f32.mrb[0].mxu0
      %v964 = vadd.f32 %v880, %v963
      %v965 = vpop.f32.mrb[0].mxu0
      %966 = vdwg.mxu0
      %v967 = vld [vmem:[%s13] sm:$0x1]
      %v969 = vlaneseq
      %v970 = vshrl.u32 %v969, 7
      %v971 = vsub.s32 0, %v970
      %v972 = vrot.slane %v967, %v971
      %v974 = vadd.f32 %v959, %v972
      %v975 = vadd.f32 %v964, %v972
      %v976 = vmax.f32 %v597, 0.0
      %v977 = vmax.f32 %v598, 0.0
      %v978 = vmax.f32 %v599, 0.0
      %v979 = vmax.f32 %v974, 0.0
      %v980 = vmax.f32 %v975, 0.0
      %981 = vmatprep.subr.mxu0 0.0
      %982 = vmatpush1.msra.mxu0 %v979
      %983 = vmatprep.subr.mxu0 0.0
      %984 = vmatpush1.msra.mxu0 %v980
      %985 = vmatprep.subr.mxu0 0.0
      %986 = vmatpush1.msra.mxu0 0.0
      %987 = vmatprep.subr.mxu0 0.0
      %988 = vmatpush1.msra.mxu0 0.0
      %989 = vmatprep.subr.mxu0 0.0
      %990 = vmatpush1.msra.mxu0 0.0
      %991 = vmatprep.subr.mxu0 0.0
      %992 = vmatpush1.msra.mxu0 0.0
      %993 = vmatprep.subr.mxu0 0.0
      %994 = vmatpush1.msra.mxu0 0.0
      %995 = vmatprep.subr.mxu0 0.0
      %996 = vmatpush1.msra.mxu0 0.0
      %997 = vmatprep.subr.mxu0 0.0
      %998 = vmatpush1.msra.mxu0 0.0
      %999 = vmatprep.subr.mxu0 0.0
      %1000 = vmatpush1.msra.mxu0 0.0
      %1001 = vmatprep.subr.mxu0 0.0
      %1002 = vmatpush1.msra.mxu0 0.0
      %1003 = vmatprep.subr.mxu0 0.0
      %1004 = vmatpush1.msra.mxu0 0.0
      %1005 = vmatprep.subr.mxu0 0.0
      %1006 = vmatpush1.msra.mxu0 0.0
      %1007 = vmatprep.subr.mxu0 0.0
      %1008 = vmatpush1.msra.mxu0 0.0
      %1009 = vmatprep.subr.mxu0 0.0
      %1010 = vmatpush1.msra.mxu0 0.0
      %1011 = vmatprep.subr.mxu0 0.0
      %1012 = vmatpush1.msra.mxu0 0.0
      %1013 = vmatprep.subr.mxu0 0.0
      %1014 = vmatpush1.msra.mxu0 0.0
      %1015 = vmatprep.subr.mxu0 0.0
      %1016 = vmatpush1.msra.mxu0 0.0
      %1017 = vmatprep.subr.mxu0 0.0
      %1018 = vmatpush1.msra.mxu0 0.0
      %1019 = vmatprep.subr.mxu0 0.0
      %1020 = vmatpush1.msra.mxu0 0.0
      %1021 = vmatprep.subr.mxu0 0.0
      %1022 = vmatpush1.msra.mxu0 0.0
      %1023 = vmatprep.subr.mxu0 0.0
      %1024 = vmatpush1.msra.mxu0 0.0
      %1025 = vmatprep.subr.mxu0 0.0
      %1026 = vmatpush1.msra.mxu0 0.0
      %1027 = vmatprep.subr.mxu0 0.0
      %1028 = vmatpush1.msra.mxu0 0.0
      %1029 = vmatprep.subr.mxu0 0.0
      %1030 = vmatpush1.msra.mxu0 0.0
      %1031 = vmatprep.subr.mxu0 0.0
      %1032 = vmatpush1.msra.mxu0 0.0
      %1033 = vmatprep.subr.mxu0 0.0
      %1034 = vmatpush1.msra.mxu0 0.0
      %1035 = vmatprep.subr.mxu0 0.0
      %1036 = vmatpush1.msra.mxu0 0.0
      %1037 = vmatprep.subr.mxu0 0.0
      %1038 = vmatpush1.msra.mxu0 0.0
      %1039 = vmatprep.subr.mxu0 0.0
      %1040 = vmatpush1.msra.mxu0 0.0
      %1041 = vmatprep.subr.mxu0 0.0
      %1042 = vmatpush1.msra.mxu0 0.0
      %1043 = vmatprep.subr.mxu0 0.0
      %1044 = vmatpush1.msra.mxu0 0.0
      %1045 = vmatprep.mubr.f32.mxu0 0.0
      %1046 = vmatmul.mubr.f32.gmra.mrb[0].mxu0 %v191
      %v1047 = vpop.f32.mrb[0].mxu0
      %v1048 = vadd.f32 0.0, %v1047
      %v1049 = vpop.f32.mrb[0].mxu0
      %1050 = vmatprep.mubr.f32.mxu0 0.0
      %1051 = vmatmul.mubr.f32.gmra.mrb[0].mxu0 %v194
      %v1052 = vpop.f32.mrb[0].mxu0
      %v1053 = vadd.f32 0.0, %v1052
      %v1054 = vpop.f32.mrb[0].mxu0
      %1055 = vmatprep.mubr.f32.mxu0 0.0
      %1056 = vmatmul.mubr.f32.gmra.mrb[0].mxu0 %v197
      %v1057 = vpop.f32.mrb[0].mxu0
      %v1058 = vadd.f32 0.0, %v1057
      %v1059 = vpop.f32.mrb[0].mxu0
      %1060 = vmatprep.mubr.f32.mxu0 0.0
      %1061 = vmatmul.mubr.f32.gmra.mrb[0].mxu0 %v200
      %v1062 = vpop.f32.mrb[0].mxu0
      %v1063 = vadd.f32 0.0, %v1062
      %v1064 = vpop.f32.mrb[0].mxu0
      %1065 = vmatprep.mubr.f32.mxu0 0.0
      %1066 = vmatmul.mubr.f32.gmra.mrb[0].mxu0 %v203
      %v1067 = vpop.f32.mrb[0].mxu0
      %v1068 = vadd.f32 0.0, %v1067
      %v1069 = vpop.f32.mrb[0].mxu0
      %1070 = vdwg.mxu0
      %1071 = vmatprep.subr.mxu0 0.0
      %1072 = vmatpush1.msra.mxu0 %v1048
      %1073 = vmatprep.subr.mxu0 0.0
      %1074 = vmatpush1.msra.mxu0 %v1053
      %1075 = vmatprep.subr.mxu0 0.0
      %1076 = vmatpush1.msra.mxu0 %v1058
      %1077 = vmatprep.subr.mxu0 0.0
      %1078 = vmatpush1.msra.mxu0 %v1063
      %1079 = vmatprep.subr.mxu0 0.0
      %1080 = vmatpush1.msra.mxu0 %v1068
      %1081 = vmatprep.subr.mxu0 0.0
      %1082 = vmatpush1.msra.mxu0 0.0
      %1083 = vmatprep.subr.mxu0 0.0
      %1084 = vmatpush1.msra.mxu0 0.0
      %1085 = vmatprep.subr.mxu0 0.0
      %1086 = vmatpush1.msra.mxu0 0.0
      %1087 = vmatprep.subr.mxu0 0.0
      %1088 = vmatpush1.msra.mxu0 0.0
      %1089 = vmatprep.subr.mxu0 0.0
      %1090 = vmatpush1.msra.mxu0 0.0
      %1091 = vmatprep.subr.mxu0 0.0
      %1092 = vmatpush1.msra.mxu0 0.0
      %1093 = vmatprep.subr.mxu0 0.0
      %1094 = vmatpush1.msra.mxu0 0.0
      %1095 = vmatprep.subr.mxu0 0.0
      %1096 = vmatpush1.msra.mxu0 0.0
      %1097 = vmatprep.subr.mxu0 0.0
      %1098 = vmatpush1.msra.mxu0 0.0
      %1099 = vmatprep.subr.mxu0 0.0
      %1100 = vmatpush1.msra.mxu0 0.0
      %1101 = vmatprep.subr.mxu0 0.0
      %1102 = vmatpush1.msra.mxu0 0.0
      %1103 = vmatprep.subr.mxu0 0.0
      %1104 = vmatpush1.msra.mxu0 0.0
      %1105 = vmatprep.subr.mxu0 0.0
      %1106 = vmatpush1.msra.mxu0 0.0
      %1107 = vmatprep.subr.mxu0 0.0
      %1108 = vmatpush1.msra.mxu0 0.0
      %1109 = vmatprep.subr.mxu0 0.0
      %1110 = vmatpush1.msra.mxu0 0.0
      %1111 = vmatprep.subr.mxu0 0.0
      %1112 = vmatpush1.msra.mxu0 0.0
      %1113 = vmatprep.subr.mxu0 0.0
      %1114 = vmatpush1.msra.mxu0 0.0
      %1115 = vmatprep.subr.mxu0 0.0
      %1116 = vmatpush1.msra.mxu0 0.0
      %1117 = vmatprep.subr.mxu0 0.0
      %1118 = vmatpush1.msra.mxu0 0.0
      %1119 = vmatprep.subr.mxu0 0.0
      %1120 = vmatpush1.msra.mxu0 0.0
      %1121 = vmatprep.subr.mxu0 0.0
      %1122 = vmatpush1.msra.mxu0 0.0
      %1123 = vmatprep.subr.mxu0 0.0
      %1124 = vmatpush1.msra.mxu0 0.0
      %1125 = vmatprep.subr.mxu0 0.0
      %1126 = vmatpush1.msra.mxu0 0.0
      %1127 = vmatprep.subr.mxu0 0.0
      %1128 = vmatpush1.msra.mxu0 0.0
      %1129 = vmatprep.subr.mxu0 0.0
      %1130 = vmatpush1.msra.mxu0 0.0
      %1131 = vmatprep.subr.mxu0 0.0
      %1132 = vmatpush1.msra.mxu0 0.0
      %1133 = vmatprep.subr.mxu0 0.0
      %1134 = vmatpush1.msra.mxu0 0.0
      %1135 = vmatprep.mubr.f32.mxu0 0.0
      %1136 = vmatmul.mubr.f32.gmra.mrb[0].mxu0 %v297
      %v1137 = vpop.f32.mrb[0].mxu0
      %v1138 = vadd.f32 0.0, %v1137
      %v1139 = vpop.f32.mrb[0].mxu0
      %1140 = vmatprep.mubr.f32.mxu0 0.0
      %1141 = vmatmul.mubr.f32.gmra.mrb[0].mxu0 %v300
      %v1142 = vpop.f32.mrb[0].mxu0
      %v1143 = vadd.f32 0.0, %v1142
      %v1144 = vpop.f32.mrb[0].mxu0
      %1145 = vmatprep.mubr.f32.mxu0 0.0
      %1146 = vmatmul.mubr.f32.gmra.mrb[0].mxu0 %v303
      %v1147 = vpop.f32.mrb[0].mxu0
      %v1148 = vadd.f32 0.0, %v1147
      %v1149 = vpop.f32.mrb[0].mxu0
      %1150 = vdwg.mxu0
      %v1151 = vmul.f32 %v1138, %v388
      %v1152 = vmul.f32 %v1143, %v393
      %v1153 = vmul.f32 %v1148, %v398
      %v1154 = vld [vmem:[%s14] sm:$0xff]
      %v1155 = vld [vmem:[%s14 + $0x8] sm:$0xff]
      %v1156 = vld [vmem:[%s14 + $0x10] sm:$0xff]
      %v1157 = vld [vmem:[%s14 + $0x18] sm:$0xff]
      %v1158 = vld [vmem:[%s15] sm:$0xff]
      %v1159 = vld [vmem:[%s15 + $0x8] sm:$0xff]
      %v1160 = vld [vmem:[%s15 + $0x10] sm:$0xff]
      %v1161 = vld [vmem:[%s15 + $0x18] sm:$0xff]
      %vm1162 = vcmask 261120
      %v1164 = vsel %vm1162, %v976, 0
      %v1167 = vsel %vm1162, %v977, 0
      %v1170 = vsel %vm1162, %v978, 0
      %1172 = vmatprep.subr.mxu0 0.0
      %1173 = vmatpush1.msra.mxu0 %v1158
      %1174 = vmatprep.subr.mxu0 0.0
      %1175 = vmatpush1.msra.mxu0 %v1159
      %1176 = vmatprep.subr.mxu0 0.0
      %1177 = vmatpush1.msra.mxu0 %v1160
      %1178 = vmatprep.subr.mxu0 0.0
      %1179 = vmatpush1.msra.mxu0 %v1161
      %1180 = vmatprep.subr.mxu0 0.0
      %1181 = vmatpush1.msra.mxu0 0.0
      %1182 = vmatprep.subr.mxu0 0.0
      %1183 = vmatpush1.msra.mxu0 0.0
      %1184 = vmatprep.subr.mxu0 0.0
      %1185 = vmatpush1.msra.mxu0 0.0
      %1186 = vmatprep.subr.mxu0 0.0
      %1187 = vmatpush1.msra.mxu0 0.0
      %1188 = vmatprep.subr.mxu0 0.0
      %1189 = vmatpush1.msra.mxu0 0.0
      %1190 = vmatprep.subr.mxu0 0.0
      %1191 = vmatpush1.msra.mxu0 0.0
      %1192 = vmatprep.subr.mxu0 0.0
      %1193 = vmatpush1.msra.mxu0 0.0
      %1194 = vmatprep.subr.mxu0 0.0
      %1195 = vmatpush1.msra.mxu0 0.0
      %1196 = vmatprep.subr.mxu0 0.0
      %1197 = vmatpush1.msra.mxu0 0.0
      %1198 = vmatprep.subr.mxu0 0.0
      %1199 = vmatpush1.msra.mxu0 0.0
      %1200 = vmatprep.subr.mxu0 0.0
      %1201 = vmatpush1.msra.mxu0 0.0
      %1202 = vmatprep.subr.mxu0 0.0
      %1203 = vmatpush1.msra.mxu0 0.0
      %1204 = vmatprep.subr.mxu0 0.0
      %1205 = vmatpush1.msra.mxu0 0.0
      %1206 = vmatprep.subr.mxu0 0.0
      %1207 = vmatpush1.msra.mxu0 0.0
      %1208 = vmatprep.subr.mxu0 0.0
      %1209 = vmatpush1.msra.mxu0 0.0
      %1210 = vmatprep.subr.mxu0 0.0
      %1211 = vmatpush1.msra.mxu0 0.0
      %1212 = vmatprep.subr.mxu0 0.0
      %1213 = vmatpush1.msra.mxu0 0.0
      %1214 = vmatprep.subr.mxu0 0.0
      %1215 = vmatpush1.msra.mxu0 0.0
      %1216 = vmatprep.subr.mxu0 0.0
      %1217 = vmatpush1.msra.mxu0 0.0
      %1218 = vmatprep.subr.mxu0 0.0
      %1219 = vmatpush1.msra.mxu0 0.0
      %1220 = vmatprep.subr.mxu0 0.0
      %1221 = vmatpush1.msra.mxu0 0.0
      %1222 = vmatprep.subr.mxu0 0.0
      %1223 = vmatpush1.msra.mxu0 0.0
      %1224 = vmatprep.subr.mxu0 0.0
      %1225 = vmatpush1.msra.mxu0 0.0
      %1226 = vmatprep.subr.mxu0 0.0
      %1227 = vmatpush1.msra.mxu0 0.0
      %1228 = vmatprep.subr.mxu0 0.0
      %1229 = vmatpush1.msra.mxu0 0.0
      %1230 = vmatprep.subr.mxu0 0.0
      %1231 = vmatpush1.msra.mxu0 0.0
      %1232 = vmatprep.subr.mxu0 0.0
      %1233 = vmatpush1.msra.mxu0 0.0
      %1234 = vmatprep.subr.mxu0 0.0
      %1235 = vmatpush1.msra.mxu0 0.0
      %1236 = vmatprep.mubr.f32.mxu0 0.0
      %1237 = vmatmul.mubr.f32.gmra.mrb[0].mxu0 %v1164
      %v1238 = vpop.f32.mrb[0].mxu0
      %v1239 = vadd.f32 0.0, %v1238
      %v1240 = vpop.f32.mrb[0].mxu0
      %1241 = vmatprep.mubr.f32.mxu0 0.0
      %1242 = vmatmul.mubr.f32.gmra.mrb[0].mxu0 %v1167
      %v1243 = vpop.f32.mrb[0].mxu0
      %v1244 = vadd.f32 0.0, %v1243
      %v1245 = vpop.f32.mrb[0].mxu0
      %1246 = vmatprep.mubr.f32.mxu0 0.0
      %1247 = vmatmul.mubr.f32.gmra.mrb[0].mxu0 %v1170
      %v1248 = vpop.f32.mrb[0].mxu0
      %v1249 = vadd.f32 0.0, %v1248
      %v1250 = vpop.f32.mrb[0].mxu0
      %1251 = vdwg.mxu0
      %v1253 = vsel %vm1162, %v1151, 0
      %v1256 = vsel %vm1162, %v1152, 0
      %v1259 = vsel %vm1162, %v1153, 0
      %1261 = vmatprep.subr.mxu0 0.0
      %1262 = vmatpush1.msra.mxu0 %v1154
      %1263 = vmatprep.subr.mxu0 0.0
      %1264 = vmatpush1.msra.mxu0 %v1155
      %1265 = vmatprep.subr.mxu0 0.0
      %1266 = vmatpush1.msra.mxu0 %v1156
      %1267 = vmatprep.subr.mxu0 0.0
      %1268 = vmatpush1.msra.mxu0 %v1157
      %1269 = vmatprep.subr.mxu0 0.0
      %1270 = vmatpush1.msra.mxu0 0.0
      %1271 = vmatprep.subr.mxu0 0.0
      %1272 = vmatpush1.msra.mxu0 0.0
      %1273 = vmatprep.subr.mxu0 0.0
      %1274 = vmatpush1.msra.mxu0 0.0
      %1275 = vmatprep.subr.mxu0 0.0
      %1276 = vmatpush1.msra.mxu0 0.0
      %1277 = vmatprep.subr.mxu0 0.0
      %1278 = vmatpush1.msra.mxu0 0.0
      %1279 = vmatprep.subr.mxu0 0.0
      %1280 = vmatpush1.msra.mxu0 0.0
      %1281 = vmatprep.subr.mxu0 0.0
      %1282 = vmatpush1.msra.mxu0 0.0
      %1283 = vmatprep.subr.mxu0 0.0
      %1284 = vmatpush1.msra.mxu0 0.0
      %1285 = vmatprep.subr.mxu0 0.0
      %1286 = vmatpush1.msra.mxu0 0.0
      %1287 = vmatprep.subr.mxu0 0.0
      %1288 = vmatpush1.msra.mxu0 0.0
      %1289 = vmatprep.subr.mxu0 0.0
      %1290 = vmatpush1.msra.mxu0 0.0
      %1291 = vmatprep.subr.mxu0 0.0
      %1292 = vmatpush1.msra.mxu0 0.0
      %1293 = vmatprep.subr.mxu0 0.0
      %1294 = vmatpush1.msra.mxu0 0.0
      %1295 = vmatprep.subr.mxu0 0.0
      %1296 = vmatpush1.msra.mxu0 0.0
      %1297 = vmatprep.subr.mxu0 0.0
      %1298 = vmatpush1.msra.mxu0 0.0
      %1299 = vmatprep.subr.mxu0 0.0
      %1300 = vmatpush1.msra.mxu0 0.0
      %1301 = vmatprep.subr.mxu0 0.0
      %1302 = vmatpush1.msra.mxu0 0.0
      %1303 = vmatprep.subr.mxu0 0.0
      %1304 = vmatpush1.msra.mxu0 0.0
      %1305 = vmatprep.subr.mxu0 0.0
      %1306 = vmatpush1.msra.mxu0 0.0
      %1307 = vmatprep.subr.mxu0 0.0
      %1308 = vmatpush1.msra.mxu0 0.0
      %1309 = vmatprep.subr.mxu0 0.0
      %1310 = vmatpush1.msra.mxu0 0.0
      %1311 = vmatprep.subr.mxu0 0.0
      %1312 = vmatpush1.msra.mxu0 0.0
      %1313 = vmatprep.subr.mxu0 0.0
      %1314 = vmatpush1.msra.mxu0 0.0
      %1315 = vmatprep.subr.mxu0 0.0
      %1316 = vmatpush1.msra.mxu0 0.0
      %1317 = vmatprep.subr.mxu0 0.0
      %1318 = vmatpush1.msra.mxu0 0.0
      %1319 = vmatprep.subr.mxu0 0.0
      %1320 = vmatpush1.msra.mxu0 0.0
      %1321 = vmatprep.subr.mxu0 0.0
      %1322 = vmatpush1.msra.mxu0 0.0
      %1323 = vmatprep.subr.mxu0 0.0
      %1324 = vmatpush1.msra.mxu0 0.0
      %1325 = vmatprep.mubr.f32.mxu0 0.0
      %1326 = vmatmul.mubr.f32.gmra.mrb[0].mxu0 %v1253
      %v1327 = vpop.f32.mrb[0].mxu0
      %v1328 = vadd.f32 %v1239, %v1327
      %v1329 = vpop.f32.mrb[0].mxu0
      %1330 = vmatprep.mubr.f32.mxu0 0.0
      %1331 = vmatmul.mubr.f32.gmra.mrb[0].mxu0 %v1256
      %v1332 = vpop.f32.mrb[0].mxu0
      %v1333 = vadd.f32 %v1244, %v1332
      %v1334 = vpop.f32.mrb[0].mxu0
      %1335 = vmatprep.mubr.f32.mxu0 0.0
      %1336 = vmatmul.mubr.f32.gmra.mrb[0].mxu0 %v1259
      %v1337 = vpop.f32.mrb[0].mxu0
      %v1338 = vadd.f32 %v1249, %v1337
      %v1339 = vpop.f32.mrb[0].mxu0
      %1340 = vdwg.mxu0
      %v1341 = vld [vmem:[%s16] sm:$0x1]
      %v1343 = vlaneseq
      %v1344 = vshrl.u32 %v1343, 7
      %v1345 = vsub.s32 0, %v1344
      %v1346 = vrot.slane %v1341, %v1345
      %v1348 = vadd.f32 %v1328, %v1346
      %v1349 = vadd.f32 %v1333, %v1346
      %v1350 = vadd.f32 %v1338, %v1346
      %1351 = vmatprep.subr.mxu0 0.0
      %1352 = vmatpush1.msra.mxu0 %v976
      %1353 = vmatprep.subr.mxu0 0.0
      %1354 = vmatpush1.msra.mxu0 %v977
      %1355 = vmatprep.subr.mxu0 0.0
      %1356 = vmatpush1.msra.mxu0 %v978
      %1357 = vmatprep.subr.mxu0 0.0
      %1358 = vmatpush1.msra.mxu0 0.0
      %1359 = vmatprep.subr.mxu0 0.0
      %1360 = vmatpush1.msra.mxu0 0.0
      %1361 = vmatprep.subr.mxu0 0.0
      %1362 = vmatpush1.msra.mxu0 0.0
      %1363 = vmatprep.subr.mxu0 0.0
      %1364 = vmatpush1.msra.mxu0 0.0
      %1365 = vmatprep.subr.mxu0 0.0
      %1366 = vmatpush1.msra.mxu0 0.0
      %1367 = vmatprep.subr.mxu0 0.0
      %1368 = vmatpush1.msra.mxu0 0.0
      %1369 = vmatprep.subr.mxu0 0.0
      %1370 = vmatpush1.msra.mxu0 0.0
      %1371 = vmatprep.subr.mxu0 0.0
      %1372 = vmatpush1.msra.mxu0 0.0
      %1373 = vmatprep.subr.mxu0 0.0
      %1374 = vmatpush1.msra.mxu0 0.0
      %1375 = vmatprep.subr.mxu0 0.0
      %1376 = vmatpush1.msra.mxu0 0.0
      %1377 = vmatprep.subr.mxu0 0.0
      %1378 = vmatpush1.msra.mxu0 0.0
      %1379 = vmatprep.subr.mxu0 0.0
      %1380 = vmatpush1.msra.mxu0 0.0
      %1381 = vmatprep.subr.mxu0 0.0
      %1382 = vmatpush1.msra.mxu0 0.0
      %1383 = vmatprep.subr.mxu0 0.0
      %1384 = vmatpush1.msra.mxu0 0.0
      %1385 = vmatprep.subr.mxu0 0.0
      %1386 = vmatpush1.msra.mxu0 0.0
      %1387 = vmatprep.subr.mxu0 0.0
      %1388 = vmatpush1.msra.mxu0 0.0
      %1389 = vmatprep.subr.mxu0 0.0
      %1390 = vmatpush1.msra.mxu0 0.0
      %1391 = vmatprep.subr.mxu0 0.0
      %1392 = vmatpush1.msra.mxu0 0.0
      %1393 = vmatprep.subr.mxu0 0.0
      %1394 = vmatpush1.msra.mxu0 0.0
      %1395 = vmatprep.subr.mxu0 0.0
      %1396 = vmatpush1.msra.mxu0 0.0
      %1397 = vmatprep.subr.mxu0 0.0
      %1398 = vmatpush1.msra.mxu0 0.0
      %1399 = vmatprep.subr.mxu0 0.0
      %1400 = vmatpush1.msra.mxu0 0.0
      %1401 = vmatprep.subr.mxu0 0.0
      %1402 = vmatpush1.msra.mxu0 0.0
      %1403 = vmatprep.subr.mxu0 0.0
      %1404 = vmatpush1.msra.mxu0 0.0
      %1405 = vmatprep.subr.mxu0 0.0
      %1406 = vmatpush1.msra.mxu0 0.0
      %1407 = vmatprep.subr.mxu0 0.0
      %1408 = vmatpush1.msra.mxu0 0.0
      %1409 = vmatprep.subr.mxu0 0.0
      %1410 = vmatpush1.msra.mxu0 0.0
      %1411 = vmatprep.subr.mxu0 0.0
      %1412 = vmatpush1.msra.mxu0 0.0
      %1413 = vmatprep.subr.mxu0 0.0
      %1414 = vmatpush1.msra.mxu0 0.0
      %1415 = vmatprep.mubr.f32.mxu0 0.0
      %1416 = vmatmul.mubr.f32.gmra.mrb[0].mxu0 %v602
      %v1417 = vpop.f32.mrb[0].mxu0
      %v1418 = vadd.f32 0.0, %v1417
      %v1419 = vpop.f32.mrb[0].mxu0
      %1420 = vmatprep.mubr.f32.mxu0 0.0
      %1421 = vmatmul.mubr.f32.gmra.mrb[0].mxu0 %v605
      %v1422 = vpop.f32.mrb[0].mxu0
      %v1423 = vadd.f32 0.0, %v1422
      %v1424 = vpop.f32.mrb[0].mxu0
      %1425 = vmatprep.mubr.f32.mxu0 0.0
      %1426 = vmatmul.mubr.f32.gmra.mrb[0].mxu0 %v608
      %v1427 = vpop.f32.mrb[0].mxu0
      %v1428 = vadd.f32 0.0, %v1427
      %v1429 = vpop.f32.mrb[0].mxu0
      %1430 = vmatprep.mubr.f32.mxu0 0.0
      %1431 = vmatmul.mubr.f32.gmra.mrb[0].mxu0 %v611
      %v1432 = vpop.f32.mrb[0].mxu0
      %v1433 = vadd.f32 0.0, %v1432
      %v1434 = vpop.f32.mrb[0].mxu0
      %1435 = vmatprep.mubr.f32.mxu0 0.0
      %1436 = vmatmul.mubr.f32.gmra.mrb[0].mxu0 %v614
      %v1437 = vpop.f32.mrb[0].mxu0
      %v1438 = vadd.f32 0.0, %v1437
      %v1439 = vpop.f32.mrb[0].mxu0
      %1440 = vdwg.mxu0
      %1441 = vmatprep.subr.mxu0 0.0
      %1442 = vmatpush1.msra.mxu0 %v1418
      %1443 = vmatprep.subr.mxu0 0.0
      %1444 = vmatpush1.msra.mxu0 %v1423
      %1445 = vmatprep.subr.mxu0 0.0
      %1446 = vmatpush1.msra.mxu0 %v1428
      %1447 = vmatprep.subr.mxu0 0.0
      %1448 = vmatpush1.msra.mxu0 %v1433
      %1449 = vmatprep.subr.mxu0 0.0
      %1450 = vmatpush1.msra.mxu0 %v1438
      %1451 = vmatprep.subr.mxu0 0.0
      %1452 = vmatpush1.msra.mxu0 0.0
      %1453 = vmatprep.subr.mxu0 0.0
      %1454 = vmatpush1.msra.mxu0 0.0
      %1455 = vmatprep.subr.mxu0 0.0
      %1456 = vmatpush1.msra.mxu0 0.0
      %1457 = vmatprep.subr.mxu0 0.0
      %1458 = vmatpush1.msra.mxu0 0.0
      %1459 = vmatprep.subr.mxu0 0.0
      %1460 = vmatpush1.msra.mxu0 0.0
      %1461 = vmatprep.subr.mxu0 0.0
      %1462 = vmatpush1.msra.mxu0 0.0
      %1463 = vmatprep.subr.mxu0 0.0
      %1464 = vmatpush1.msra.mxu0 0.0
      %1465 = vmatprep.subr.mxu0 0.0
      %1466 = vmatpush1.msra.mxu0 0.0
      %1467 = vmatprep.subr.mxu0 0.0
      %1468 = vmatpush1.msra.mxu0 0.0
      %1469 = vmatprep.subr.mxu0 0.0
      %1470 = vmatpush1.msra.mxu0 0.0
      %1471 = vmatprep.subr.mxu0 0.0
      %1472 = vmatpush1.msra.mxu0 0.0
      %1473 = vmatprep.subr.mxu0 0.0
      %1474 = vmatpush1.msra.mxu0 0.0
      %1475 = vmatprep.subr.mxu0 0.0
      %1476 = vmatpush1.msra.mxu0 0.0
      %1477 = vmatprep.subr.mxu0 0.0
      %1478 = vmatpush1.msra.mxu0 0.0
      %1479 = vmatprep.subr.mxu0 0.0
      %1480 = vmatpush1.msra.mxu0 0.0
      %1481 = vmatprep.subr.mxu0 0.0
      %1482 = vmatpush1.msra.mxu0 0.0
      %1483 = vmatprep.subr.mxu0 0.0
      %1484 = vmatpush1.msra.mxu0 0.0
      %1485 = vmatprep.subr.mxu0 0.0
      %1486 = vmatpush1.msra.mxu0 0.0
      %1487 = vmatprep.subr.mxu0 0.0
      %1488 = vmatpush1.msra.mxu0 0.0
      %1489 = vmatprep.subr.mxu0 0.0
      %1490 = vmatpush1.msra.mxu0 0.0
      %1491 = vmatprep.subr.mxu0 0.0
      %1492 = vmatpush1.msra.mxu0 0.0
      %1493 = vmatprep.subr.mxu0 0.0
      %1494 = vmatpush1.msra.mxu0 0.0
      %1495 = vmatprep.subr.mxu0 0.0
      %1496 = vmatpush1.msra.mxu0 0.0
      %1497 = vmatprep.subr.mxu0 0.0
      %1498 = vmatpush1.msra.mxu0 0.0
      %1499 = vmatprep.subr.mxu0 0.0
      %1500 = vmatpush1.msra.mxu0 0.0
      %1501 = vmatprep.subr.mxu0 0.0
      %1502 = vmatpush1.msra.mxu0 0.0
      %1503 = vmatprep.subr.mxu0 0.0
      %1504 = vmatpush1.msra.mxu0 0.0
      %1505 = vmatprep.mubr.f32.mxu0 0.0
      %1506 = vmatmul.mubr.f32.gmra.mrb[0].mxu0 %v707
      %v1507 = vpop.f32.mrb[0].mxu0
      %v1508 = vadd.f32 0.0, %v1507
      %v1509 = vpop.f32.mrb[0].mxu0
      %1510 = vmatprep.mubr.f32.mxu0 0.0
      %1511 = vmatmul.mubr.f32.gmra.mrb[0].mxu0 %v710
      %v1512 = vpop.f32.mrb[0].mxu0
      %v1513 = vadd.f32 0.0, %v1512
      %v1514 = vpop.f32.mrb[0].mxu0
      %1515 = vdwg.mxu0
      %v1516 = vmul.f32 %v1508, %v790
      %v1517 = vmul.f32 %v1513, %v795
      %v1518 = vld [vmem:[%s17] sm:$0xff]
      %v1519 = vld [vmem:[%s17 + $0x8] sm:$0xff]
      %v1520 = vld [vmem:[%s17 + $0x10] sm:$0xff]
      %v1521 = vld [vmem:[%s17 + $0x18] sm:$0xff]
      %v1522 = vld [vmem:[%s18] sm:$0xff]
      %v1523 = vld [vmem:[%s18 + $0x8] sm:$0xff]
      %v1524 = vld [vmem:[%s18 + $0x10] sm:$0xff]
      %v1525 = vld [vmem:[%s18 + $0x18] sm:$0xff]
      %v1527 = vsel %vm1162, %v979, 0
      %v1530 = vsel %vm1162, %v980, 0
      %1532 = vmatprep.subr.mxu0 0.0
      %1533 = vmatpush1.msra.mxu0 %v1522
      %1534 = vmatprep.subr.mxu0 0.0
      %1535 = vmatpush1.msra.mxu0 %v1523
      %1536 = vmatprep.subr.mxu0 0.0
      %1537 = vmatpush1.msra.mxu0 %v1524
      %1538 = vmatprep.subr.mxu0 0.0
      %1539 = vmatpush1.msra.mxu0 %v1525
      %1540 = vmatprep.subr.mxu0 0.0
      %1541 = vmatpush1.msra.mxu0 0.0
      %1542 = vmatprep.subr.mxu0 0.0
      %1543 = vmatpush1.msra.mxu0 0.0
      %1544 = vmatprep.subr.mxu0 0.0
      %1545 = vmatpush1.msra.mxu0 0.0
      %1546 = vmatprep.subr.mxu0 0.0
      %1547 = vmatpush1.msra.mxu0 0.0
      %1548 = vmatprep.subr.mxu0 0.0
      %1549 = vmatpush1.msra.mxu0 0.0
      %1550 = vmatprep.subr.mxu0 0.0
      %1551 = vmatpush1.msra.mxu0 0.0
      %1552 = vmatprep.subr.mxu0 0.0
      %1553 = vmatpush1.msra.mxu0 0.0
      %1554 = vmatprep.subr.mxu0 0.0
      %1555 = vmatpush1.msra.mxu0 0.0
      %1556 = vmatprep.subr.mxu0 0.0
      %1557 = vmatpush1.msra.mxu0 0.0
      %1558 = vmatprep.subr.mxu0 0.0
      %1559 = vmatpush1.msra.mxu0 0.0
      %1560 = vmatprep.subr.mxu0 0.0
      %1561 = vmatpush1.msra.mxu0 0.0
      %1562 = vmatprep.subr.mxu0 0.0
      %1563 = vmatpush1.msra.mxu0 0.0
      %1564 = vmatprep.subr.mxu0 0.0
      %1565 = vmatpush1.msra.mxu0 0.0
      %1566 = vmatprep.subr.mxu0 0.0
      %1567 = vmatpush1.msra.mxu0 0.0
      %1568 = vmatprep.subr.mxu0 0.0
      %1569 = vmatpush1.msra.mxu0 0.0
      %1570 = vmatprep.subr.mxu0 0.0
      %1571 = vmatpush1.msra.mxu0 0.0
      %1572 = vmatprep.subr.mxu0 0.0
      %1573 = vmatpush1.msra.mxu0 0.0
      %1574 = vmatprep.subr.mxu0 0.0
      %1575 = vmatpush1.msra.mxu0 0.0
      %1576 = vmatprep.subr.mxu0 0.0
      %1577 = vmatpush1.msra.mxu0 0.0
      %1578 = vmatprep.subr.mxu0 0.0
      %1579 = vmatpush1.msra.mxu0 0.0
      %1580 = vmatprep.subr.mxu0 0.0
      %1581 = vmatpush1.msra.mxu0 0.0
      %1582 = vmatprep.subr.mxu0 0.0
      %1583 = vmatpush1.msra.mxu0 0.0
      %1584 = vmatprep.subr.mxu0 0.0
      %1585 = vmatpush1.msra.mxu0 0.0
      %1586 = vmatprep.subr.mxu0 0.0
      %1587 = vmatpush1.msra.mxu0 0.0
      %1588 = vmatprep.subr.mxu0 0.0
      %1589 = vmatpush1.msra.mxu0 0.0
      %1590 = vmatprep.subr.mxu0 0.0
      %1591 = vmatpush1.msra.mxu0 0.0
      %1592 = vmatprep.subr.mxu0 0.0
      %1593 = vmatpush1.msra.mxu0 0.0
      %1594 = vmatprep.subr.mxu0 0.0
      %1595 = vmatpush1.msra.mxu0 0.0
      %1596 = vmatprep.mubr.f32.mxu0 0.0
      %1597 = vmatmul.mubr.f32.gmra.mrb[0].mxu0 %v1527
      %v1598 = vpop.f32.mrb[0].mxu0
      %v1599 = vadd.f32 0.0, %v1598
      %v1600 = vpop.f32.mrb[0].mxu0
      %1601 = vmatprep.mubr.f32.mxu0 0.0
      %1602 = vmatmul.mubr.f32.gmra.mrb[0].mxu0 %v1530
      %v1603 = vpop.f32.mrb[0].mxu0
      %v1604 = vadd.f32 0.0, %v1603
      %v1605 = vpop.f32.mrb[0].mxu0
      %1606 = vdwg.mxu0
      %v1608 = vsel %vm1162, %v1516, 0
      %v1611 = vsel %vm1162, %v1517, 0
      %1613 = vmatprep.subr.mxu0 0.0
      %1614 = vmatpush1.msra.mxu0 %v1518
      %1615 = vmatprep.subr.mxu0 0.0
      %1616 = vmatpush1.msra.mxu0 %v1519
      %1617 = vmatprep.subr.mxu0 0.0
      %1618 = vmatpush1.msra.mxu0 %v1520
      %1619 = vmatprep.subr.mxu0 0.0
      %1620 = vmatpush1.msra.mxu0 %v1521
      %1621 = vmatprep.subr.mxu0 0.0
      %1622 = vmatpush1.msra.mxu0 0.0
      %1623 = vmatprep.subr.mxu0 0.0
      %1624 = vmatpush1.msra.mxu0 0.0
      %1625 = vmatprep.subr.mxu0 0.0
      %1626 = vmatpush1.msra.mxu0 0.0
      %1627 = vmatprep.subr.mxu0 0.0
      %1628 = vmatpush1.msra.mxu0 0.0
      %1629 = vmatprep.subr.mxu0 0.0
      %1630 = vmatpush1.msra.mxu0 0.0
      %1631 = vmatprep.subr.mxu0 0.0
      %1632 = vmatpush1.msra.mxu0 0.0
      %1633 = vmatprep.subr.mxu0 0.0
      %1634 = vmatpush1.msra.mxu0 0.0
      %1635 = vmatprep.subr.mxu0 0.0
      %1636 = vmatpush1.msra.mxu0 0.0
      %1637 = vmatprep.subr.mxu0 0.0
      %1638 = vmatpush1.msra.mxu0 0.0
      %1639 = vmatprep.subr.mxu0 0.0
      %1640 = vmatpush1.msra.mxu0 0.0
      %1641 = vmatprep.subr.mxu0 0.0
      %1642 = vmatpush1.msra.mxu0 0.0
      %1643 = vmatprep.subr.mxu0 0.0
      %1644 = vmatpush1.msra.mxu0 0.0
      %1645 = vmatprep.subr.mxu0 0.0
      %1646 = vmatpush1.msra.mxu0 0.0
      %1647 = vmatprep.subr.mxu0 0.0
      %1648 = vmatpush1.msra.mxu0 0.0
      %1649 = vmatprep.subr.mxu0 0.0
      %1650 = vmatpush1.msra.mxu0 0.0
      %1651 = vmatprep.subr.mxu0 0.0
      %1652 = vmatpush1.msra.mxu0 0.0
      %1653 = vmatprep.subr.mxu0 0.0
      %1654 = vmatpush1.msra.mxu0 0.0
      %1655 = vmatprep.subr.mxu0 0.0
      %1656 = vmatpush1.msra.mxu0 0.0
      %1657 = vmatprep.subr.mxu0 0.0
      %1658 = vmatpush1.msra.mxu0 0.0
      %1659 = vmatprep.subr.mxu0 0.0
      %1660 = vmatpush1.msra.mxu0 0.0
      %1661 = vmatprep.subr.mxu0 0.0
      %1662 = vmatpush1.msra.mxu0 0.0
      %1663 = vmatprep.subr.mxu0 0.0
      %1664 = vmatpush1.msra.mxu0 0.0
      %1665 = vmatprep.subr.mxu0 0.0
      %1666 = vmatpush1.msra.mxu0 0.0
      %1667 = vmatprep.subr.mxu0 0.0
      %1668 = vmatpush1.msra.mxu0 0.0
      %1669 = vmatprep.subr.mxu0 0.0
      %1670 = vmatpush1.msra.mxu0 0.0
      %1671 = vmatprep.subr.mxu0 0.0
      %1672 = vmatpush1.msra.mxu0 0.0
      %1673 = vmatprep.subr.mxu0 0.0
      %1674 = vmatpush1.msra.mxu0 0.0
      %1675 = vmatprep.subr.mxu0 0.0
      %1676 = vmatpush1.msra.mxu0 0.0
      %1677 = vmatprep.mubr.f32.mxu0 0.0
      %1678 = vmatmul.mubr.f32.gmra.mrb[0].mxu0 %v1608
      %v1679 = vpop.f32.mrb[0].mxu0
      %v1680 = vadd.f32 %v1599, %v1679
      %v1681 = vpop.f32.mrb[0].mxu0
      %1682 = vmatprep.mubr.f32.mxu0 0.0
      %1683 = vmatmul.mubr.f32.gmra.mrb[0].mxu0 %v1611
      %v1684 = vpop.f32.mrb[0].mxu0
      %v1685 = vadd.f32 %v1604, %v1684
      %v1686 = vpop.f32.mrb[0].mxu0
      %1687 = vdwg.mxu0
      %v1688 = vld [vmem:[%s19] sm:$0x1]
      %v1690 = vlaneseq
      %v1691 = vshrl.u32 %v1690, 7
      %v1692 = vsub.s32 0, %v1691
      %v1693 = vrot.slane %v1688, %v1692
      %v1695 = vadd.f32 %v1680, %v1693
      %v1696 = vadd.f32 %v1685, %v1693
      %v1697 = vld [vmem:[%s20] sm:$0xff]
      %v1698 = vld [vmem:[%s20 + $0x8] sm:$0xff]
      %v1699 = vld [vmem:[%s20 + $0x10] sm:$0xff]
      %v1700 = vld [vmem:[%s20 + $0x18] sm:$0xff]
      %v1702 = vsel %vm1162, %v1695, 0
      %v1705 = vsel %vm1162, %v1696, 0
      %1707 = vmatprep.subr.mxu0 0.0
      %1708 = vmatpush1.msra.mxu0 %v1697
      %1709 = vmatprep.subr.mxu0 0.0
      %1710 = vmatpush1.msra.mxu0 %v1698
      %1711 = vmatprep.subr.mxu0 0.0
      %1712 = vmatpush1.msra.mxu0 %v1699
      %1713 = vmatprep.subr.mxu0 0.0
      %1714 = vmatpush1.msra.mxu0 %v1700
      %1715 = vmatprep.subr.mxu0 0.0
      %1716 = vmatpush1.msra.mxu0 0.0
      %1717 = vmatprep.subr.mxu0 0.0
      %1718 = vmatpush1.msra.mxu0 0.0
      %1719 = vmatprep.subr.mxu0 0.0
      %1720 = vmatpush1.msra.mxu0 0.0
      %1721 = vmatprep.subr.mxu0 0.0
      %1722 = vmatpush1.msra.mxu0 0.0
      %1723 = vmatprep.subr.mxu0 0.0
      %1724 = vmatpush1.msra.mxu0 0.0
      %1725 = vmatprep.subr.mxu0 0.0
      %1726 = vmatpush1.msra.mxu0 0.0
      %1727 = vmatprep.subr.mxu0 0.0
      %1728 = vmatpush1.msra.mxu0 0.0
      %1729 = vmatprep.subr.mxu0 0.0
      %1730 = vmatpush1.msra.mxu0 0.0
      %1731 = vmatprep.subr.mxu0 0.0
      %1732 = vmatpush1.msra.mxu0 0.0
      %1733 = vmatprep.subr.mxu0 0.0
      %1734 = vmatpush1.msra.mxu0 0.0
      %1735 = vmatprep.subr.mxu0 0.0
      %1736 = vmatpush1.msra.mxu0 0.0
      %1737 = vmatprep.subr.mxu0 0.0
      %1738 = vmatpush1.msra.mxu0 0.0
      %1739 = vmatprep.subr.mxu0 0.0
      %1740 = vmatpush1.msra.mxu0 0.0
      %1741 = vmatprep.subr.mxu0 0.0
      %1742 = vmatpush1.msra.mxu0 0.0
      %1743 = vmatprep.subr.mxu0 0.0
      %1744 = vmatpush1.msra.mxu0 0.0
      %1745 = vmatprep.subr.mxu0 0.0
      %1746 = vmatpush1.msra.mxu0 0.0
      %1747 = vmatprep.subr.mxu0 0.0
      %1748 = vmatpush1.msra.mxu0 0.0
      %1749 = vmatprep.subr.mxu0 0.0
      %1750 = vmatpush1.msra.mxu0 0.0
      %1751 = vmatprep.subr.mxu0 0.0
      %1752 = vmatpush1.msra.mxu0 0.0
      %1753 = vmatprep.subr.mxu0 0.0
      %1754 = vmatpush1.msra.mxu0 0.0
      %1755 = vmatprep.subr.mxu0 0.0
      %1756 = vmatpush1.msra.mxu0 0.0
      %1757 = vmatprep.subr.mxu0 0.0
      %1758 = vmatpush1.msra.mxu0 0.0
      %1759 = vmatprep.subr.mxu0 0.0
      %1760 = vmatpush1.msra.mxu0 0.0
      %1761 = vmatprep.subr.mxu0 0.0
      %1762 = vmatpush1.msra.mxu0 0.0
      %1763 = vmatprep.subr.mxu0 0.0
      %1764 = vmatpush1.msra.mxu0 0.0
      %1765 = vmatprep.subr.mxu0 0.0
      %1766 = vmatpush1.msra.mxu0 0.0
      %1767 = vmatprep.subr.mxu0 0.0
      %1768 = vmatpush1.msra.mxu0 0.0
      %1769 = vmatprep.subr.mxu0 0.0
      %1770 = vmatpush1.msra.mxu0 0.0
      %1771 = vmatprep.mubr.f32.mxu0 0.0
      %1772 = vmatmul.mubr.f32.gmra.mrb[0].mxu0 %v1702
      %v1773 = vpop.f32.mrb[0].mxu0
      %v1774 = vadd.f32 0.0, %v1773
      %v1775 = vpop.f32.mrb[0].mxu0
      %1776 = vmatprep.mubr.f32.mxu0 0.0
      %1777 = vmatmul.mubr.f32.gmra.mrb[0].mxu0 %v1705
      %v1778 = vpop.f32.mrb[0].mxu0
      %v1779 = vadd.f32 0.0, %v1778
      %v1780 = vpop.f32.mrb[0].mxu0
      %1781 = vdwg.mxu0
      %1782 = vst.msk [vmem:[#allocation2] sm:$0xff] %vm1162, %v1774
      %1783 = vst.msk [vmem:[#allocation2 + $0x8] sm:$0xff] %vm1162, %v1779
      %v1784 = vld [vmem:[%s21] sm:$0xff]
      %v1785 = vld [vmem:[%s21 + $0x8] sm:$0xff]
      %v1786 = vld [vmem:[%s21 + $0x10] sm:$0xff]
      %v1787 = vld [vmem:[%s21 + $0x18] sm:$0xff]
      %v1789 = vsel %vm1162, %v1348, 0
      %v1792 = vsel %vm1162, %v1349, 0
      %v1795 = vsel %vm1162, %v1350, 0
      %1797 = vmatprep.subr.mxu0 0.0
      %1798 = vmatpush1.msra.mxu0 %v1784
      %1799 = vmatprep.subr.mxu0 0.0
      %1800 = vmatpush1.msra.mxu0 %v1785
      %1801 = vmatprep.subr.mxu0 0.0
      %1802 = vmatpush1.msra.mxu0 %v1786
      %1803 = vmatprep.subr.mxu0 0.0
      %1804 = vmatpush1.msra.mxu0 %v1787
      %1805 = vmatprep.subr.mxu0 0.0
      %1806 = vmatpush1.msra.mxu0 0.0
      %1807 = vmatprep.subr.mxu0 0.0
      %1808 = vmatpush1.msra.mxu0 0.0
      %1809 = vmatprep.subr.mxu0 0.0
      %1810 = vmatpush1.msra.mxu0 0.0
      %1811 = vmatprep.subr.mxu0 0.0
      %1812 = vmatpush1.msra.mxu0 0.0
      %1813 = vmatprep.subr.mxu0 0.0
      %1814 = vmatpush1.msra.mxu0 0.0
      %1815 = vmatprep.subr.mxu0 0.0
      %1816 = vmatpush1.msra.mxu0 0.0
      %1817 = vmatprep.subr.mxu0 0.0
      %1818 = vmatpush1.msra.mxu0 0.0
      %1819 = vmatprep.subr.mxu0 0.0
      %1820 = vmatpush1.msra.mxu0 0.0
      %1821 = vmatprep.subr.mxu0 0.0
      %1822 = vmatpush1.msra.mxu0 0.0
      %1823 = vmatprep.subr.mxu0 0.0
      %1824 = vmatpush1.msra.mxu0 0.0
      %1825 = vmatprep.subr.mxu0 0.0
      %1826 = vmatpush1.msra.mxu0 0.0
      %1827 = vmatprep.subr.mxu0 0.0
      %1828 = vmatpush1.msra.mxu0 0.0
      %1829 = vmatprep.subr.mxu0 0.0
      %1830 = vmatpush1.msra.mxu0 0.0
      %1831 = vmatprep.subr.mxu0 0.0
      %1832 = vmatpush1.msra.mxu0 0.0
      %1833 = vmatprep.subr.mxu0 0.0
      %1834 = vmatpush1.msra.mxu0 0.0
      %1835 = vmatprep.subr.mxu0 0.0
      %1836 = vmatpush1.msra.mxu0 0.0
      %1837 = vmatprep.subr.mxu0 0.0
      %1838 = vmatpush1.msra.mxu0 0.0
      %1839 = vmatprep.subr.mxu0 0.0
      %1840 = vmatpush1.msra.mxu0 0.0
      %1841 = vmatprep.subr.mxu0 0.0
      %1842 = vmatpush1.msra.mxu0 0.0
      %1843 = vmatprep.subr.mxu0 0.0
      %1844 = vmatpush1.msra.mxu0 0.0
      %1845 = vmatprep.subr.mxu0 0.0
      %1846 = vmatpush1.msra.mxu0 0.0
      %1847 = vmatprep.subr.mxu0 0.0
      %1848 = vmatpush1.msra.mxu0 0.0
      %1849 = vmatprep.subr.mxu0 0.0
      %1850 = vmatpush1.msra.mxu0 0.0
      %1851 = vmatprep.subr.mxu0 0.0
      %1852 = vmatpush1.msra.mxu0 0.0
      %1853 = vmatprep.subr.mxu0 0.0
      %1854 = vmatpush1.msra.mxu0 0.0
      %1855 = vmatprep.subr.mxu0 0.0
      %1856 = vmatpush1.msra.mxu0 0.0
      %1857 = vmatprep.subr.mxu0 0.0
      %1858 = vmatpush1.msra.mxu0 0.0
      %1859 = vmatprep.subr.mxu0 0.0
      %1860 = vmatpush1.msra.mxu0 0.0
      %1861 = vmatprep.mubr.f32.mxu0 0.0
      %1862 = vmatmul.mubr.f32.gmra.mrb[0].mxu0 %v1789
      %v1863 = vpop.f32.mrb[0].mxu0
      %v1864 = vadd.f32 0.0, %v1863
      %v1865 = vpop.f32.mrb[0].mxu0
      %1866 = vmatprep.mubr.f32.mxu0 0.0
      %1867 = vmatmul.mubr.f32.gmra.mrb[0].mxu0 %v1792
      %v1868 = vpop.f32.mrb[0].mxu0
      %v1869 = vadd.f32 0.0, %v1868
      %v1870 = vpop.f32.mrb[0].mxu0
      %1871 = vmatprep.mubr.f32.mxu0 0.0
      %1872 = vmatmul.mubr.f32.gmra.mrb[0].mxu0 %v1795
      %v1873 = vpop.f32.mrb[0].mxu0
      %v1874 = vadd.f32 0.0, %v1873
      %v1875 = vpop.f32.mrb[0].mxu0
      %1876 = vdwg.mxu0
      %1877 = vst.msk [vmem:[#allocation2 + $0x10] sm:$0xff] %vm1162, %v1864
      %1878 = vst.msk [vmem:[#allocation2 + $0x18] sm:$0xff] %vm1162, %v1869
      %1879 = vst.msk [vmem:[#allocation2 + $0x20] sm:$0xff] %vm1162, %v1874
    $region113: #{tpu_custom_call.1} parent=1 // pred_fallthru
      _
    %v1880 = vlaneseq
    %v1881 = vand.u32 %v1880, 127
    %v1882 = vld [vmem:[%s25] sm:$0xff]
    %v1883 = vld [vmem:[%s25 + $0x8] sm:$0xff]
    %v1884 = vld [vmem:[%s25 + $0x10] sm:$0xff]
    %v1885 = vld [vmem:[%s25 + $0x18] sm:$0xff]
    %v1886 = vld [vmem:[%s25 + $0x20] sm:$0xff]
    %v1887 = vld [vmem:[%s25 + $0x28] sm:$0xff]
    %v1888 = vld [vmem:[%s25 + $0x30] sm:$0xff]
    %v1889 = vld [vmem:[%s25 + $0x38] sm:$0xff]
    %v1890 = vld [vmem:[%s25 + $0x40] sm:$0xff]
    %v1891 = vld [vmem:[%s25 + $0x48] sm:$0xff]
    %v1892 = vld [vmem:[%s25 + $0x50] sm:$0xff]
    %v1893 = vld [vmem:[%s25 + $0x58] sm:$0xff]
    %v1894 = vld [vmem:[%s25 + $0x60] sm:$0xff]
    %v1895 = vld [vmem:[%s25 + $0x68] sm:$0xff]
    %v1896 = vld [vmem:[%s25 + $0x70] sm:$0xff]
    %v1897 = vld [vmem:[%s25 + $0x78] sm:$0xff]
    %1898 = vset.pattern.permute.xlu0 0
    %1899 = vperm.xlu0 %1898, %v1882
    %v1900 = vpop.permute.xlu0 %1899
    %1901 = vset.pattern.permute.xlu0 0
    %1902 = vperm.xlu0 %1901, %v1883
    %v1903 = vpop.permute.xlu0 %1902
    %1904 = vset.pattern.permute.xlu0 0
    %1905 = vperm.xlu0 %1904, %v1884
    %v1906 = vpop.permute.xlu0 %1905
    %1907 = vset.pattern.permute.xlu0 0
    %1908 = vperm.xlu0 %1907, %v1885
    %v1909 = vpop.permute.xlu0 %1908
    %1910 = vset.pattern.permute.xlu0 0
    %1911 = vperm.xlu0 %1910, %v1886
    %v1912 = vpop.permute.xlu0 %1911
    %1913 = vset.pattern.permute.xlu0 0
    %1914 = vperm.xlu0 %1913, %v1887
    %v1915 = vpop.permute.xlu0 %1914
    %1916 = vset.pattern.permute.xlu0 0
    %1917 = vperm.xlu0 %1916, %v1888
    %v1918 = vpop.permute.xlu0 %1917
    %1919 = vset.pattern.permute.xlu0 0
    %1920 = vperm.xlu0 %1919, %v1889
    %v1921 = vpop.permute.xlu0 %1920
    %1922 = vset.pattern.permute.xlu0 0
    %1923 = vperm.xlu0 %1922, %v1890
    %v1924 = vpop.permute.xlu0 %1923
    %1925 = vset.pattern.permute.xlu0 0
    %1926 = vperm.xlu0 %1925, %v1891
    %v1927 = vpop.permute.xlu0 %1926
    %1928 = vset.pattern.permute.xlu0 0
    %1929 = vperm.xlu0 %1928, %v1892
    %v1930 = vpop.permute.xlu0 %1929
    %1931 = vset.pattern.permute.xlu0 0
    %1932 = vperm.xlu0 %1931, %v1893
    %v1933 = vpop.permute.xlu0 %1932
    %1934 = vset.pattern.permute.xlu0 0
    %1935 = vperm.xlu0 %1934, %v1894
    %v1936 = vpop.permute.xlu0 %1935
    %1937 = vset.pattern.permute.xlu0 0
    %1938 = vperm.xlu0 %1937, %v1895
    %v1939 = vpop.permute.xlu0 %1938
    %1940 = vset.pattern.permute.xlu0 0
    %1941 = vperm.xlu0 %1940, %v1896
    %v1942 = vpop.permute.xlu0 %1941
    %1943 = vset.pattern.permute.xlu0 0
    %1944 = vperm.xlu0 %1943, %v1897
    %v1945 = vpop.permute.xlu0 %1944
    %vm1946 = vcmp.eq.s32.totalorder %v1881, %v1900
    %vm1947 = vcmp.eq.s32.totalorder %v1881, %v1903
    %vm1948 = vcmp.eq.s32.totalorder %v1881, %v1906
    %vm1949 = vcmp.eq.s32.totalorder %v1881, %v1909
    %vm1950 = vcmp.eq.s32.totalorder %v1881, %v1912
    %vm1951 = vcmp.eq.s32.totalorder %v1881, %v1915
    %vm1952 = vcmp.eq.s32.totalorder %v1881, %v1918
    %vm1953 = vcmp.eq.s32.totalorder %v1881, %v1921
    %vm1954 = vcmp.eq.s32.totalorder %v1881, %v1924
    %vm1955 = vcmp.eq.s32.totalorder %v1881, %v1927
    %vm1956 = vcmp.eq.s32.totalorder %v1881, %v1930
    %vm1957 = vcmp.eq.s32.totalorder %v1881, %v1933
    %vm1958 = vcmp.eq.s32.totalorder %v1881, %v1936
    %vm1959 = vcmp.eq.s32.totalorder %v1881, %v1939
    %vm1960 = vcmp.eq.s32.totalorder %v1881, %v1942
    %vm1961 = vcmp.eq.s32.totalorder %v1881, %v1945
    %v1962 = vld [vmem:[%s26] sm:$0xff]
    %v1963 = vld [vmem:[%s26 + $0x8] sm:$0xff]
    %v1964 = vld [vmem:[%s26 + $0x10] sm:$0xff]
    %v1965 = vld [vmem:[%s26 + $0x18] sm:$0xff]
    %v1966 = vld [vmem:[%s26 + $0x20] sm:$0xff]
    %v1967 = vld [vmem:[%s26 + $0x28] sm:$0xff]
    %v1968 = vld [vmem:[%s26 + $0x30] sm:$0xff]
    %v1969 = vld [vmem:[%s26 + $0x38] sm:$0xff]
    %v1970 = vld [vmem:[%s26 + $0x40] sm:$0xff]
    %v1971 = vld [vmem:[%s26 + $0x48] sm:$0xff]
    %v1972 = vld [vmem:[%s26 + $0x50] sm:$0xff]
    %v1973 = vld [vmem:[%s26 + $0x58] sm:$0xff]
    %v1974 = vld [vmem:[%s26 + $0x60] sm:$0xff]
    %v1975 = vld [vmem:[%s26 + $0x68] sm:$0xff]
    %v1976 = vld [vmem:[%s26 + $0x70] sm:$0xff]
    %v1977 = vld [vmem:[%s26 + $0x78] sm:$0xff]
    %1978 = vset.pattern.permute.xlu0 0
    %1979 = vperm.xlu0 %1978, %v1962
    %v1980 = vpop.permute.xlu0 %1979
    %1981 = vset.pattern.permute.xlu0 0
    %1982 = vperm.xlu0 %1981, %v1963
    %v1983 = vpop.permute.xlu0 %1982
    %1984 = vset.pattern.permute.xlu0 0
    %1985 = vperm.xlu0 %1984, %v1964
    %v1986 = vpop.permute.xlu0 %1985
    %1987 = vset.pattern.permute.xlu0 0
    %1988 = vperm.xlu0 %1987, %v1965
    %v1989 = vpop.permute.xlu0 %1988
    %1990 = vset.pattern.permute.xlu0 0
    %1991 = vperm.xlu0 %1990, %v1966
    %v1992 = vpop.permute.xlu0 %1991
    %1993 = vset.pattern.permute.xlu0 0
    %1994 = vperm.xlu0 %1993, %v1967
    %v1995 = vpop.permute.xlu0 %1994
    %1996 = vset.pattern.permute.xlu0 0
    %1997 = vperm.xlu0 %1996, %v1968
    %v1998 = vpop.permute.xlu0 %1997
    %1999 = vset.pattern.permute.xlu0 0
    %2000 = vperm.xlu0 %1999, %v1969
    %v2001 = vpop.permute.xlu0 %2000
    %2002 = vset.pattern.permute.xlu0 0
    %2003 = vperm.xlu0 %2002, %v1970
    %v2004 = vpop.permute.xlu0 %2003
    %2005 = vset.pattern.permute.xlu0 0
    %2006 = vperm.xlu0 %2005, %v1971
    %v2007 = vpop.permute.xlu0 %2006
    %2008 = vset.pattern.permute.xlu0 0
    %2009 = vperm.xlu0 %2008, %v1972
    %v2010 = vpop.permute.xlu0 %2009
    %2011 = vset.pattern.permute.xlu0 0
    %2012 = vperm.xlu0 %2011, %v1973
    %v2013 = vpop.permute.xlu0 %2012
    %2014 = vset.pattern.permute.xlu0 0
    %2015 = vperm.xlu0 %2014, %v1974
    %v2016 = vpop.permute.xlu0 %2015
    %2017 = vset.pattern.permute.xlu0 0
    %2018 = vperm.xlu0 %2017, %v1975
    %v2019 = vpop.permute.xlu0 %2018
    %2020 = vset.pattern.permute.xlu0 0
    %2021 = vperm.xlu0 %2020, %v1976
    %v2022 = vpop.permute.xlu0 %2021
    %2023 = vset.pattern.permute.xlu0 0
    %2024 = vperm.xlu0 %2023, %v1977
    %v2025 = vpop.permute.xlu0 %2024
    %vm2026 = vcmp.eq.s32.totalorder %v1881, %v1980
    %vm2027 = vcmp.eq.s32.totalorder %v1881, %v1983
    %vm2028 = vcmp.eq.s32.totalorder %v1881, %v1986
    %vm2029 = vcmp.eq.s32.totalorder %v1881, %v1989
    %vm2030 = vcmp.eq.s32.totalorder %v1881, %v1992
    %vm2031 = vcmp.eq.s32.totalorder %v1881, %v1995
    %vm2032 = vcmp.eq.s32.totalorder %v1881, %v1998
    %vm2033 = vcmp.eq.s32.totalorder %v1881, %v2001
    %vm2034 = vcmp.eq.s32.totalorder %v1881, %v2004
    %vm2035 = vcmp.eq.s32.totalorder %v1881, %v2007
    %vm2036 = vcmp.eq.s32.totalorder %v1881, %v2010
    %vm2037 = vcmp.eq.s32.totalorder %v1881, %v2013
    %vm2038 = vcmp.eq.s32.totalorder %v1881, %v2016
    %vm2039 = vcmp.eq.s32.totalorder %v1881, %v2019
    %vm2040 = vcmp.eq.s32.totalorder %v1881, %v2022
    %vm2041 = vcmp.eq.s32.totalorder %v1881, %v2025
    %vm2042 = vmor %vm1946, %vm2026
    %vm2043 = vmor %vm1947, %vm2027
    %vm2044 = vmor %vm1948, %vm2028
    %vm2045 = vmor %vm1949, %vm2029
    %vm2046 = vmor %vm1950, %vm2030
    %vm2047 = vmor %vm1951, %vm2031
    %vm2048 = vmor %vm1952, %vm2032
    %vm2049 = vmor %vm1953, %vm2033
    %vm2050 = vmor %vm1954, %vm2034
    %vm2051 = vmor %vm1955, %vm2035
    %vm2052 = vmor %vm1956, %vm2036
    %vm2053 = vmor %vm1957, %vm2037
    %vm2054 = vmor %vm1958, %vm2038
    %vm2055 = vmor %vm1959, %vm2039
    %vm2056 = vmor %vm1960, %vm2040
    %vm2057 = vmor %vm1961, %vm2041
    %v2058 = vsel %vm2042, 1.0, 0.0
    %v2059 = vsel %vm2043, 1.0, 0.0
    %v2060 = vsel %vm2044, 1.0, 0.0
    %v2061 = vsel %vm2045, 1.0, 0.0
    %v2062 = vsel %vm2046, 1.0, 0.0
    %v2063 = vsel %vm2047, 1.0, 0.0
    %v2064 = vsel %vm2048, 1.0, 0.0
    %v2065 = vsel %vm2049, 1.0, 0.0
    %v2066 = vsel %vm2050, 1.0, 0.0
    %v2067 = vsel %vm2051, 1.0, 0.0
    %v2068 = vsel %vm2052, 1.0, 0.0
    %v2069 = vsel %vm2053, 1.0, 0.0
    %v2070 = vsel %vm2054, 1.0, 0.0
    %v2071 = vsel %vm2055, 1.0, 0.0
    %v2072 = vsel %vm2056, 1.0, 0.0
    %v2073 = vsel %vm2057, 1.0, 0.0
    %v2074 = vld [vmem:[#allocation2] sm:$0xff]
    %v2075 = vld [vmem:[#allocation2 + $0x8] sm:$0xff]
    %v2076 = vld [vmem:[#allocation2 + $0x10] sm:$0xff]
    %v2077 = vld [vmem:[#allocation2 + $0x18] sm:$0xff]
    %v2078 = vld [vmem:[#allocation2 + $0x20] sm:$0xff]
    %v2079 = vld [vmem:[%s22] sm:$0x1]
    %v2081 = vlaneseq
    %v2082 = vshrl.u32 %v2081, 7
    %v2083 = vsub.s32 0, %v2082
    %v2084 = vrot.slane %v2079, %v2083
    %vm2086 = vcmask 326656
    %v2088 = vsel %vm2086, %v2058, 0
    %v2091 = vsel %vm2086, %v2059, 0
    %v2094 = vsel %vm2086, %v2060, 0
    %v2097 = vsel %vm2086, %v2061, 0
    %v2100 = vsel %vm2086, %v2062, 0
    %v2103 = vsel %vm2086, %v2063, 0
    %v2106 = vsel %vm2086, %v2064, 0
    %v2109 = vsel %vm2086, %v2065, 0
    %v2112 = vsel %vm2086, %v2066, 0
    %v2115 = vsel %vm2086, %v2067, 0
    %v2118 = vsel %vm2086, %v2068, 0
    %v2121 = vsel %vm2086, %v2069, 0
    %v2124 = vsel %vm2086, %v2070, 0
    %v2127 = vsel %vm2086, %v2071, 0
    %v2130 = vsel %vm2086, %v2072, 0
    %v2133 = vsel %vm2086, %v2073, 0
    %2135 = vmatprep.subr.mxu0 0.0
    %2136 = vmatpush1.msra.mxu0 %v2074
    %2137 = vmatprep.subr.mxu0 0.0
    %2138 = vmatpush1.msra.mxu0 %v2075
    %2139 = vmatprep.subr.mxu0 0.0
    %2140 = vmatpush1.msra.mxu0 %v2076
    %2141 = vmatprep.subr.mxu0 0.0
    %2142 = vmatpush1.msra.mxu0 %v2077
    %2143 = vmatprep.subr.mxu0 0.0
    %2144 = vmatpush1.msra.mxu0 %v2078
    %2145 = vmatprep.subr.mxu0 0.0
    %2146 = vmatpush1.msra.mxu0 0.0
    %2147 = vmatprep.subr.mxu0 0.0
    %2148 = vmatpush1.msra.mxu0 0.0
    %2149 = vmatprep.subr.mxu0 0.0
    %2150 = vmatpush1.msra.mxu0 0.0
    %2151 = vmatprep.subr.mxu0 0.0
    %2152 = vmatpush1.msra.mxu0 0.0
    %2153 = vmatprep.subr.mxu0 0.0
    %2154 = vmatpush1.msra.mxu0 0.0
    %2155 = vmatprep.subr.mxu0 0.0
    %2156 = vmatpush1.msra.mxu0 0.0
    %2157 = vmatprep.subr.mxu0 0.0
    %2158 = vmatpush1.msra.mxu0 0.0
    %2159 = vmatprep.subr.mxu0 0.0
    %2160 = vmatpush1.msra.mxu0 0.0
    %2161 = vmatprep.subr.mxu0 0.0
    %2162 = vmatpush1.msra.mxu0 0.0
    %2163 = vmatprep.subr.mxu0 0.0
    %2164 = vmatpush1.msra.mxu0 0.0
    %2165 = vmatprep.subr.mxu0 0.0
    %2166 = vmatpush1.msra.mxu0 0.0
    %2167 = vmatprep.subr.mxu0 0.0
    %2168 = vmatpush1.msra.mxu0 0.0
    %2169 = vmatprep.subr.mxu0 0.0
    %2170 = vmatpush1.msra.mxu0 0.0
    %2171 = vmatprep.subr.mxu0 0.0
    %2172 = vmatpush1.msra.mxu0 0.0
    %2173 = vmatprep.subr.mxu0 0.0
    %2174 = vmatpush1.msra.mxu0 0.0
    %2175 = vmatprep.subr.mxu0 0.0
    %2176 = vmatpush1.msra.mxu0 0.0
    %2177 = vmatprep.subr.mxu0 0.0
    %2178 = vmatpush1.msra.mxu0 0.0
    %2179 = vmatprep.subr.mxu0 0.0
    %2180 = vmatpush1.msra.mxu0 0.0
    %2181 = vmatprep.subr.mxu0 0.0
    %2182 = vmatpush1.msra.mxu0 0.0
    %2183 = vmatprep.subr.mxu0 0.0
    %2184 = vmatpush1.msra.mxu0 0.0
    %2185 = vmatprep.subr.mxu0 0.0
    %2186 = vmatpush1.msra.mxu0 0.0
    %2187 = vmatprep.subr.mxu0 0.0
    %2188 = vmatpush1.msra.mxu0 0.0
    %2189 = vmatprep.subr.mxu0 0.0
    %2190 = vmatpush1.msra.mxu0 0.0
    %2191 = vmatprep.subr.mxu0 0.0
    %2192 = vmatpush1.msra.mxu0 0.0
    %2193 = vmatprep.subr.mxu0 0.0
    %2194 = vmatpush1.msra.mxu0 0.0
    %2195 = vmatprep.subr.mxu0 0.0
    %2196 = vmatpush1.msra.mxu0 0.0
    %2197 = vmatprep.subr.mxu0 0.0
    %2198 = vmatpush1.msra.mxu0 0.0
    %2199 = vmatprep.mubr.f32.mxu0 0.0
    %2200 = vmatmul.mubr.f32.gmra.mrb[0].mxu0 %v2088
    %v2201 = vpop.f32.mrb[0].mxu0
    %v2202 = vadd.f32 %v2084, %v2201
    %v2203 = vpop.f32.mrb[0].mxu0
    %2204 = vmatprep.mubr.f32.mxu0 0.0
    %2205 = vmatmul.mubr.f32.gmra.mrb[0].mxu0 %v2091
    %v2206 = vpop.f32.mrb[0].mxu0
    %v2207 = vadd.f32 %v2084, %v2206
    %v2208 = vpop.f32.mrb[0].mxu0
    %2209 = vmatprep.mubr.f32.mxu0 0.0
    %2210 = vmatmul.mubr.f32.gmra.mrb[0].mxu0 %v2094
    %v2211 = vpop.f32.mrb[0].mxu0
    %v2212 = vadd.f32 %v2084, %v2211
    %v2213 = vpop.f32.mrb[0].mxu0
    %2214 = vmatprep.mubr.f32.mxu0 0.0
    %2215 = vmatmul.mubr.f32.gmra.mrb[0].mxu0 %v2097
    %v2216 = vpop.f32.mrb[0].mxu0
    %v2217 = vadd.f32 %v2084, %v2216
    %v2218 = vpop.f32.mrb[0].mxu0
    %2219 = vmatprep.mubr.f32.mxu0 0.0
    %2220 = vmatmul.mubr.f32.gmra.mrb[0].mxu0 %v2100
    %v2221 = vpop.f32.mrb[0].mxu0
    %v2222 = vadd.f32 %v2084, %v2221
    %v2223 = vpop.f32.mrb[0].mxu0
    %2224 = vmatprep.mubr.f32.mxu0 0.0
    %2225 = vmatmul.mubr.f32.gmra.mrb[0].mxu0 %v2103
    %v2226 = vpop.f32.mrb[0].mxu0
    %v2227 = vadd.f32 %v2084, %v2226
    %v2228 = vpop.f32.mrb[0].mxu0
    %2229 = vmatprep.mubr.f32.mxu0 0.0
    %2230 = vmatmul.mubr.f32.gmra.mrb[0].mxu0 %v2106
    %v2231 = vpop.f32.mrb[0].mxu0
    %v2232 = vadd.f32 %v2084, %v2231
    %v2233 = vpop.f32.mrb[0].mxu0
    %2234 = vmatprep.mubr.f32.mxu0 0.0
    %2235 = vmatmul.mubr.f32.gmra.mrb[0].mxu0 %v2109
    %v2236 = vpop.f32.mrb[0].mxu0
    %v2237 = vadd.f32 %v2084, %v2236
    %v2238 = vpop.f32.mrb[0].mxu0
    %2239 = vmatprep.mubr.f32.mxu0 0.0
    %2240 = vmatmul.mubr.f32.gmra.mrb[0].mxu0 %v2112
    %v2241 = vpop.f32.mrb[0].mxu0
    %v2242 = vadd.f32 %v2084, %v2241
    %v2243 = vpop.f32.mrb[0].mxu0
    %2244 = vmatprep.mubr.f32.mxu0 0.0
    %2245 = vmatmul.mubr.f32.gmra.mrb[0].mxu0 %v2115
    %v2246 = vpop.f32.mrb[0].mxu0
    %v2247 = vadd.f32 %v2084, %v2246
    %v2248 = vpop.f32.mrb[0].mxu0
    %2249 = vmatprep.mubr.f32.mxu0 0.0
    %2250 = vmatmul.mubr.f32.gmra.mrb[0].mxu0 %v2118
    %v2251 = vpop.f32.mrb[0].mxu0
    %v2252 = vadd.f32 %v2084, %v2251
    %v2253 = vpop.f32.mrb[0].mxu0
    %2254 = vmatprep.mubr.f32.mxu0 0.0
    %2255 = vmatmul.mubr.f32.gmra.mrb[0].mxu0 %v2121
    %v2256 = vpop.f32.mrb[0].mxu0
    %v2257 = vadd.f32 %v2084, %v2256
    %v2258 = vpop.f32.mrb[0].mxu0
    %2259 = vmatprep.mubr.f32.mxu0 0.0
    %2260 = vmatmul.mubr.f32.gmra.mrb[0].mxu0 %v2124
    %v2261 = vpop.f32.mrb[0].mxu0
    %v2262 = vadd.f32 %v2084, %v2261
    %v2263 = vpop.f32.mrb[0].mxu0
    %2264 = vmatprep.mubr.f32.mxu0 0.0
    %2265 = vmatmul.mubr.f32.gmra.mrb[0].mxu0 %v2127
    %v2266 = vpop.f32.mrb[0].mxu0
    %v2267 = vadd.f32 %v2084, %v2266
    %v2268 = vpop.f32.mrb[0].mxu0
    %2269 = vmatprep.mubr.f32.mxu0 0.0
    %2270 = vmatmul.mubr.f32.gmra.mrb[0].mxu0 %v2130
    %v2271 = vpop.f32.mrb[0].mxu0
    %v2272 = vadd.f32 %v2084, %v2271
    %v2273 = vpop.f32.mrb[0].mxu0
    %2274 = vmatprep.mubr.f32.mxu0 0.0
    %2275 = vmatmul.mubr.f32.gmra.mrb[0].mxu0 %v2133
    %v2276 = vpop.f32.mrb[0].mxu0
    %v2277 = vadd.f32 %v2084, %v2276
    %v2278 = vpop.f32.mrb[0].mxu0
    %2279 = vdwg.mxu0
    %v2280 = vmax.f32 %v2202, 0.0
    %v2281 = vmax.f32 %v2207, 0.0
    %v2282 = vmax.f32 %v2212, 0.0
    %v2283 = vmax.f32 %v2217, 0.0
    %v2284 = vmax.f32 %v2222, 0.0
    %v2285 = vmax.f32 %v2227, 0.0
    %v2286 = vmax.f32 %v2232, 0.0
    %v2287 = vmax.f32 %v2237, 0.0
    %v2288 = vmax.f32 %v2242, 0.0
    %v2289 = vmax.f32 %v2247, 0.0
    %v2290 = vmax.f32 %v2252, 0.0
    %v2291 = vmax.f32 %v2257, 0.0
    %v2292 = vmax.f32 %v2262, 0.0
    %v2293 = vmax.f32 %v2267, 0.0
    %v2294 = vmax.f32 %v2272, 0.0
    %v2295 = vmax.f32 %v2277, 0.0
    %v2296 = vld [vmem:[%s23] sm:$0x1]
    %v2297 = vld [vmem:[#allocation3] sm:$0x1]
    %2299 = vset.pattern.permute.xlu0 0
    %2300 = vperm.xlu0 %2299, %v2297
    %v2301 = vpop.permute.xlu0 %2300
    %v2303 = vlaneseq
    %v2304 = vshrl.u32 %v2303, 7
    %v2305 = vsub.s32 0, %v2304
    %v2306 = vrot.slane %v2301, %v2305
    %vm2307 = vcmask 261120
    %v2309 = vsel %vm2307, %v2296, 0
    %v2312 = vsel %vm2307, %v2280, 0
    %v2315 = vsel %vm2307, %v2281, 0
    %v2318 = vsel %vm2307, %v2282, 0
    %v2321 = vsel %vm2307, %v2283, 0
    %v2324 = vsel %vm2307, %v2284, 0
    %v2327 = vsel %vm2307, %v2285, 0
    %v2330 = vsel %vm2307, %v2286, 0
    %v2333 = vsel %vm2307, %v2287, 0
    %v2336 = vsel %vm2307, %v2288, 0
    %v2339 = vsel %vm2307, %v2289, 0
    %v2342 = vsel %vm2307, %v2290, 0
    %v2345 = vsel %vm2307, %v2291, 0
    %v2348 = vsel %vm2307, %v2292, 0
    %v2351 = vsel %vm2307, %v2293, 0
    %v2354 = vsel %vm2307, %v2294, 0
    %v2357 = vsel %vm2307, %v2295, 0
    %2359 = vmatprep.subr.mxu0 0.0
    %2360 = vmatpush1.xpose.msra.mxu0 %v2312
    %2361 = vmatprep.subr.mxu0 0.0
    %2362 = vmatpush1.xpose.msra.mxu0 %v2315
    %2363 = vmatprep.subr.mxu0 0.0
    %2364 = vmatpush1.xpose.msra.mxu0 %v2318
    %2365 = vmatprep.subr.mxu0 0.0
    %2366 = vmatpush1.xpose.msra.mxu0 %v2321
    %2367 = vmatprep.subr.mxu0 0.0
    %2368 = vmatpush1.xpose.msra.mxu0 %v2324
    %2369 = vmatprep.subr.mxu0 0.0
    %2370 = vmatpush1.xpose.msra.mxu0 %v2327
    %2371 = vmatprep.subr.mxu0 0.0
    %2372 = vmatpush1.xpose.msra.mxu0 %v2330
    %2373 = vmatprep.subr.mxu0 0.0
    %2374 = vmatpush1.xpose.msra.mxu0 %v2333
    %2375 = vmatprep.subr.mxu0 0.0
    %2376 = vmatpush1.xpose.msra.mxu0 %v2336
    %2377 = vmatprep.subr.mxu0 0.0
    %2378 = vmatpush1.xpose.msra.mxu0 %v2339
    %2379 = vmatprep.subr.mxu0 0.0
    %2380 = vmatpush1.xpose.msra.mxu0 %v2342
    %2381 = vmatprep.subr.mxu0 0.0
    %2382 = vmatpush1.xpose.msra.mxu0 %v2345
    %2383 = vmatprep.subr.mxu0 0.0
    %2384 = vmatpush1.xpose.msra.mxu0 %v2348
    %2385 = vmatprep.subr.mxu0 0.0
    %2386 = vmatpush1.xpose.msra.mxu0 %v2351
    %2387 = vmatprep.subr.mxu0 0.0
    %2388 = vmatpush1.xpose.msra.mxu0 %v2354
    %2389 = vmatprep.subr.mxu0 0.0
    %2390 = vmatpush1.xpose.msra.mxu0 %v2357
    %2391 = vmatprep.subr.mxu0 0.0
    %2392 = vmatpush1.xpose.msra.mxu0 0.0
    %2393 = vmatprep.subr.mxu0 0.0
    %2394 = vmatpush1.xpose.msra.mxu0 0.0
    %2395 = vmatprep.subr.mxu0 0.0
    %2396 = vmatpush1.xpose.msra.mxu0 0.0
    %2397 = vmatprep.subr.mxu0 0.0
    %2398 = vmatpush1.xpose.msra.mxu0 0.0
    %2399 = vmatprep.subr.mxu0 0.0
    %2400 = vmatpush1.xpose.msra.mxu0 0.0
    %2401 = vmatprep.subr.mxu0 0.0
    %2402 = vmatpush1.xpose.msra.mxu0 0.0
    %2403 = vmatprep.subr.mxu0 0.0
    %2404 = vmatpush1.xpose.msra.mxu0 0.0
    %2405 = vmatprep.subr.mxu0 0.0
    %2406 = vmatpush1.xpose.msra.mxu0 0.0
    %2407 = vmatprep.subr.mxu0 0.0
    %2408 = vmatpush1.xpose.msra.mxu0 0.0
    %2409 = vmatprep.subr.mxu0 0.0
    %2410 = vmatpush1.xpose.msra.mxu0 0.0
    %2411 = vmatprep.subr.mxu0 0.0
    %2412 = vmatpush1.xpose.msra.mxu0 0.0
    %2413 = vmatprep.subr.mxu0 0.0
    %2414 = vmatpush1.xpose.msra.mxu0 0.0
    %2415 = vmatprep.subr.mxu0 0.0
    %2416 = vmatpush1.xpose.msra.mxu0 0.0
    %2417 = vmatprep.subr.mxu0 0.0
    %2418 = vmatpush1.xpose.msra.mxu0 0.0
    %2419 = vmatprep.subr.mxu0 0.0
    %2420 = vmatpush1.xpose.msra.mxu0 0.0
    %2421 = vmatprep.subr.mxu0 0.0
    %2422 = vmatpush1.xpose.msra.mxu0 0.0
    %2423 = vmatprep.mubr.f32.mxu0 0.0
    %2424 = vmatmul.mubr.f32.gmra.mrb[0].mxu0 %v2309
    %v2425 = vpop.f32.mrb[0].mxu0
    %v2426 = vadd.f32 %v2306, %v2425
    %v2427 = vpop.f32.mrb[0].mxu0
    %2428 = vdwg.mxu0
    %2429 = vst [vmem:[#allocation4] sm:$0x1] %v2426
    // Predicated region
    $region114: #{tpu_custom_call.1} parent=1 // pred_check
      _
    $region115: #{tpu_custom_call.1} parent=1 // pred_check_branch
      %2431 = sbr.rel (0) target = $region117
    $region116: #{tpu_custom_call.1} parent=1 // pred_region
      %s2433 = ssub.s32 16, 16
      %2434 = vsyncadd [#allocation5], %s2433
      %s2436 = sshll.u32 [#allocation4], 4
      %s2437 = int_to_ptr.vmem [resolvable:$true] %s2436
      %2439 = dma.vmem_to_hbm [thread:$0]  %s2437, 16, %s27, [#allocation5]
    $region117: #{tpu_custom_call.1} parent=1 // pred_fallthru
      _
    // Predicated region
    $region118: #{tpu_custom_call.1} parent=1 // pred_check
      _
    $region119: #{tpu_custom_call.1} parent=1 // pred_check_branch
      %2441 = sbr.rel (0) target = $region121
    $region120: #{tpu_custom_call.1} parent=1 // pred_region
      %2442 = dma.done [#allocation5], 16
    $region121: #{tpu_custom_call.1} parent=1 // pred_fallthru
      _
    %2443 = vsyncpa [#allocation5], 1

</llo_original>
